<compile_context>
chip_gen: v7x
topology: tpu7x:2x2x1
jax: 0.10.0
libtpu: 0.0.40
codegen_flags: <defaults>
</compile_context>

<pallas_src>
import math
from functools import partial

import jax
import jax.numpy as jnp
from jax.experimental import pallas as pl
from jax.experimental.pallas import tpu as pltpu


def _round_up(v, m):
    return -(-v // m) * m


def _vmem_capacity_bytes():
    try:
        info = pltpu.get_tpu_info()
        return int(getattr(info, "vmem_capacity_bytes", 64 * 1024 * 1024))
    except Exception:  # conservative fallback (v7x physical VMEM)
        return 64 * 1024 * 1024


def _step_vmem_bytes(Th, Wo, Cin, Cout, SW, K, x_itemsize):
    """Padded-VMEM estimate for one grid step (double-buffered blocks + acc)."""
    in_blk = 4 * (Th + 1) * _round_up(SW, 8) * _round_up(Cin, 128) * x_itemsize
    out_a = _round_up(Cout, 8) * _round_up(Th * Wo, 128) * 4      # NCHW-direct
    out_b = _round_up(Th * Wo, 8) * _round_up(Cout, 128) * 4      # channels-last
    out_blk = max(out_a, out_b)
    w_blk = K * K * _round_up(Cin, 8) * _round_up(Cout, 128) * 4
    acc = Th * Wo * Cout * 4
    return 2 * in_blk + 2 * out_blk + 2 * w_blk + acc


def _pick_row_tiles(N, Ho, Wo, Cin, Cout, SW, K, x_itemsize):
    """Number of output-row tiles HT (second 'parallel' grid axis).

    Review items 5 & 6: VMEM-aware (pick the largest row tile whose per-step
    footprint fits ~1/4 of physical VMEM), any divisor of Ho is a candidate,
    and when N == 1 we force >= 2 row tiles so a 2-TensorCore part (v7x) has
    independent grid steps to shard.
    """
    budget = _vmem_capacity_bytes() // 4
    divisors = [d for d in range(1, Ho + 1) if Ho % d == 0]

    def legal(ht):
        if ht == 1:
            return True                       # full-extent output block always legal
        tw = (Ho // ht) * Wo
        return tw % 128 == 0 or tw % 8 == 0   # NCHW-direct / channels-last block

    legal_divs = [d for d in divisors if legal(d)]
    ht = next((d for d in legal_divs
               if _step_vmem_bytes(Ho // d, Wo, Cin, Cout, SW, K, x_itemsize) <= budget),
              legal_divs[-1])
    if N == 1 and ht == 1:
        bigger = [d for d in legal_divs if d >= 2]
        if bigger:
            ht = bigger[0]
    return ht


def _ms_downsampling_kernel(x_ref, w_ref, bias_ref, o_ref, *,
                            Th, Wo, Cin, K, channels_last):
    """One (batch, output-row-tile) per grid step.

    x_ref:    (2, 2, Th+1, SW, Cin)  parity-split, row-windowed padded input (bf16/f32)
    w_ref:    (K*K, Cin, Cout) f32   per-tap weights with BN scale and 1/Norm folded
    bias_ref: (1, Cout) f32          conv bias + BN shift folded
    o_ref:    (Cout, Th*Wo) (NCHW-direct)  or  (Th*Wo, Cout) (channels-last)
    """
    acc = None
    for ky in range(K):
        ph, dh = ky % 2, ky // 2
        for kx in range(K):
            pw, dw = kx % 2, kx // 2
            # Padded-input row 2*oy+ky lives in parity plane ky%2 at split-row
            # oy+ky//2; the BlockSpec already positioned the (Th+1)-row window,
            # so every tap is a fully static (Th, Wo, Cin) slice -> it feeds the
            # MXU directly with no im2col scratch stores at all.
            tap = x_ref[ph, pw, dh:dh + Th, dw:dw + Wo, :]
            lhs = tap.reshape(Th * Wo, Cin).astype(jnp.float32)
            part = jnp.dot(lhs, w_ref[ky * K + kx],
                           preferred_element_type=jnp.float32)      # (Th*Wo, Cout)
            acc = part if acc is None else acc + part
    y = acc + bias_ref[...]                                         # folded bias + BN
    if channels_last:
        o_ref[...] = y.astype(o_ref.dtype)
    else:
        o_ref[...] = jnp.transpose(y).astype(o_ref.dtype)           # -> (Cout, Th*Wo)


def ms_downsampling(x_nchw, params, *, first_layer=False,
                    min_value=0.0, max_value=4.0, norm=None,
                    stride=2, padding=1, eps=1e-5):
    norm = float(max_value) if norm is None else float(norm)
    w = params["conv_w"]      # (Cout, Cin, K, K)  PyTorch OIHW
    b = params["conv_b"]
    gamma = params["bn_gamma"]
    beta = params["bn_beta"]
    rmean = params["bn_mean"]
    rvar = params["bn_var"]

    Cout, Cin, K, _ = w.shape
    N, C, H, W = x_nchw.shape
    assert C == Cin and K == 3 and stride == 2 and padding == 1
    Ho = (H + 2 * padding - K) // stride + 1
    Wo = (W + 2 * padding - K) // stride + 1
    Hp, Wp = H + 2 * padding, W + 2 * padding
    assert Hp % 2 == 0 and Wp % 2 == 0
    SW = Wp // 2
    assert Hp // 2 == Ho + 1 and SW == Wo + 1

    # ---- MultiSpike, hoisted out of the kernel (spike(0)==0, so it commutes with
    #      zero padding).  Ship raw integer spike levels (exact in bf16 for any
    #      Norm) and fold 1/Norm into the f32 weights instead.
    x = x_nchw.astype(jnp.float32)
    if not first_layer:
        x = jnp.round(jnp.clip(x, min_value, max_value)).astype(jnp.bfloat16)
        inv_norm = 1.0 / norm
    else:
        inv_norm = 1.0

    # ---- relayout: pad, parity-split so that
    #      x[n, ph, pw, i, j, c] == x_pad[n, c, 2*i+ph, 2*j+pw]
    x = jnp.pad(x, ((0, 0), (0, 0), (padding, padding), (padding, padding)))
    x = x.reshape(N, Cin, Hp // 2, 2, SW, 2).transpose(0, 3, 5, 2, 4, 1)

    # ---- row-windowed halo tiles: per-step input block scales with Th, not H
    #      (one duplicated halo row per tile; purely Blocked BlockSpecs).
    HT = _pick_row_tiles(N, Ho, Wo, Cin, Cout, SW, K, x.dtype.itemsize)
    Th = Ho // HT
    if HT == 1:
        x_tiles = x[:, None]                                     # (N,1,2,2,Ho+1,SW,Cin)
    else:
        x_tiles = jnp.stack(
            [x[:, :, :, t * Th:t * Th + Th + 1] for t in range(HT)],
            axis=1)                                              # (N,HT,2,2,Th+1,SW,Cin)

    # ---- fold conv bias + eval-mode BatchNorm (+ 1/Norm) into weights / one bias
    eff_scale = (gamma / jnp.sqrt(rvar + eps)).astype(jnp.float32)            # (Cout,)
    w_taps = (jnp.transpose(w, (2, 3, 1, 0)).reshape(K * K, Cin, Cout)
              .astype(jnp.float32) * (eff_scale[None, None, :] * inv_norm))   # (KK,Cin,Cout)
    eff_bias = ((b - rmean) * eff_scale + beta).astype(jnp.float32).reshape(1, Cout)

    # ---- lane-dense output layout pick (review item 7)
    TWo = Th * Wo
    if TWo % 128 == 0:
        channels_last = False
    elif Cout % 128 == 0:
        channels_last = True
    else:
        channels_last = HT > 1     # NCHW-direct block is only legal untiled here

    if channels_last:
        out_shape = jax.ShapeDtypeStruct((N, Ho * Wo, Cout), jnp.float32)
        out_spec = pl.BlockSpec((None, TWo, Cout), lambda n, t: (n, t, 0))
    else:
        out_shape = jax.ShapeDtypeStruct((N, Cout, Ho * Wo), jnp.float32)
        out_spec = pl.BlockSpec((None, Cout, TWo), lambda n, t: (n, 0, t))

    vmem_limit = int(min(64 * 1024 * 1024,
                         max(32 * 1024 * 1024,
                             2 * _step_vmem_bytes(Th, Wo, Cin, Cout, SW, K,
                                                  x.dtype.itemsize) + (4 << 20))))

    kernel = partial(_ms_downsampling_kernel,
                     Th=Th, Wo=Wo, Cin=Cin, K=K, channels_last=channels_last)

    out = pl.pallas_call(
        kernel,
        out_shape=out_shape,
        grid_spec=pltpu.PrefetchScalarGridSpec(
            num_scalar_prefetch=0,
            grid=(N, HT),
            in_specs=[
                pl.BlockSpec((None, None, 2, 2, Th + 1, SW, Cin),
                             lambda n, t: (n, t, 0, 0, 0, 0, 0)),
                pl.BlockSpec((K * K, Cin, Cout), lambda n, t: (0, 0, 0)),
                pl.BlockSpec((1, Cout), lambda n, t: (0, 0)),
            ],
            out_specs=out_spec,
        ),
        compiler_params=pltpu.CompilerParams(
            dimension_semantics=("parallel", "parallel"),
            vmem_limit_bytes=vmem_limit),
    )(x_tiles, w_taps, eff_bias)

    if channels_last:
        return out.reshape(N, Ho, Wo, Cout).transpose(0, 3, 1, 2)
    return out.reshape(N, Cout, Ho, Wo)


def _reference(x_nchw, params, *, first_layer, min_value, max_value, norm, eps=1e-5):
    """Plain-JAX reference mirroring the PyTorch forward (eval-mode BN)."""
    x = x_nchw.astype(jnp.float32)
    if not first_layer:
        x = jnp.round(jnp.clip(x, min_value, max_value)) / norm
    y = jax.lax.conv_general_dilated(
        x, params["conv_w"].astype(jnp.float32),
        window_strides=(2, 2), padding=((1, 1), (1, 1)),
        dimension_numbers=("NCHW", "OIHW", "NCHW"))
    y = y + params["conv_b"][None, :, None, None]
    inv = 1.0 / jnp.sqrt(params["bn_var"] + eps)
    y = (y - params["bn_mean"][None, :, None, None]) * (params["bn_gamma"] * inv)[None, :, None, None] \
        + params["bn_beta"][None, :, None, None]
    return y


if __name__ == "__main__":
    # small shapes consistent with the module
    N, Cin, H, W = 2, 4, 16, 16
    Cout, K = 32, 3

    key = jax.random.PRNGKey(0)
    k_x, k_w, k_b, k_g, k_bt, k_m, k_v = jax.random.split(key, 7)

    x = jax.random.normal(k_x, (N, Cin, H, W), dtype=jnp.float32) * 2.0 + 1.0  # NCHW

    fan_in = Cin * K * K
    bound = 1.0 / math.sqrt(fan_in)
    params = {
        "conv_w": jax.random.uniform(k_w, (Cout, Cin, K, K), jnp.float32, -bound, bound),
        "conv_b": jax.random.uniform(k_b, (Cout,), jnp.float32, -bound, bound),
        "bn_gamma": jax.random.uniform(k_g, (Cout,), jnp.float32, 0.5, 1.5),
        "bn_beta": jax.random.normal(k_bt, (Cout,), jnp.float32) * 0.1,
        "bn_mean": jax.random.normal(k_m, (Cout,), jnp.float32) * 0.1,
        "bn_var": jax.random.uniform(k_v, (Cout,), jnp.float32, 0.5, 1.5),
    }

    spike_cfg = dict(first_layer=False, min_value=0.0, max_value=4.0, norm=4.0)

    out = ms_downsampling(x, params, **spike_cfg)
    out = jax.block_until_ready(out)

    ref = _reference(x, params, **spike_cfg)
    assert out.shape == (N, Cout, H // 2, W // 2), out.shape
    assert jnp.allclose(out, ref, atol=2e-4, rtol=2e-4), \
        float(jnp.max(jnp.abs(out - ref)))

    print("KERNEL_OK")
</pallas_src>

<mosaic_0001>
module attributes {stable_mosaic.version = 11 : i64} {
  func.func @_ms_downsampling_kernel(%arg0: i32, %arg1: i32, %arg2: memref<1x1x2x2x9x9x4xbf16, #tpu.memory_space<vmem>>, %arg3: memref<9x4x32xf32, #tpu.memory_space<vmem>>, %arg4: memref<1x32xf32, #tpu.memory_space<vmem>>, %arg5: memref<1x32x64xf32, #tpu.memory_space<vmem>>) attributes {dimension_semantics = [#tpu.dimension_semantics<parallel>, #tpu.dimension_semantics<parallel>], iteration_bounds = array<i64: 2, 1>, scalar_prefetch = 0 : i64, scratch_operands = 0 : i64, tpu.core_type = #tpu.core_type<tc>, window_params = [{transform_indices = @transform_0, window_bounds = array<i64: 1, 1, 2, 2, 9, 9, 4>}, {pipeline_mode = #tpu.pipeline_mode<synchronous>, transform_indices = @transform_1, window_bounds = array<i64: 9, 4, 32>}, {pipeline_mode = #tpu.pipeline_mode<synchronous>, transform_indices = @transform_2, window_bounds = array<i64: 1, 32>}, {transform_indices = @transform_3, window_bounds = array<i64: 1, 32, 64>}]} {
    %c0 = arith.constant 0 : index
    %c0_0 = arith.constant 0 : index
    %c0_1 = arith.constant 0 : index
    %c0_2 = arith.constant 0 : index
    %c0_3 = arith.constant 0 : index
    %c0_4 = arith.constant 0 : index
    %c0_5 = arith.constant 0 : index
    %0 = vector.load %arg2[%c0, %c0_0, %c0_1, %c0_2, %c0_3, %c0_4, %c0_5] : memref<1x1x2x2x9x9x4xbf16, #tpu.memory_space<vmem>>, vector<1x1x1x1x8x8x4xbf16>
    %1 = vector.shape_cast %0 : vector<1x1x1x1x8x8x4xbf16> to vector<8x8x4xbf16>
    %2 = vector.shape_cast %1 : vector<8x8x4xbf16> to vector<64x4xbf16>
    %3 = arith.extf %2 : vector<64x4xbf16> to vector<64x4xf32>
    %c0_6 = arith.constant 0 : index
    %c0_7 = arith.constant 0 : index
    %c0_8 = arith.constant 0 : index
    %4 = vector.load %arg3[%c0_6, %c0_7, %c0_8] : memref<9x4x32xf32, #tpu.memory_space<vmem>>, vector<1x4x32xf32>
    %5 = vector.shape_cast %4 : vector<1x4x32xf32> to vector<4x32xf32>
    %cst = arith.constant dense<0.000000e+00> : vector<64x32xf32>
    %6 = tpu.matmul %3, %5, %cst {dimension_numbers = #tpu.dot_dimension_numbers<[1], [0], [0], [1], [0, 0, 1, 1], [], []>} : vector<64x4xf32>, vector<4x32xf32>, vector<64x32xf32> -> vector<64x32xf32>
    %c0_9 = arith.constant 0 : index
    %c0_10 = arith.constant 0 : index
    %c0_11 = arith.constant 0 : index
    %c1 = arith.constant 1 : index
    %c0_12 = arith.constant 0 : index
    %c0_13 = arith.constant 0 : index
    %c0_14 = arith.constant 0 : index
    %7 = vector.load %arg2[%c0_9, %c0_10, %c0_11, %c1, %c0_12, %c0_13, %c0_14] : memref<1x1x2x2x9x9x4xbf16, #tpu.memory_space<vmem>>, vector<1x1x1x1x8x8x4xbf16>
    %8 = vector.shape_cast %7 : vector<1x1x1x1x8x8x4xbf16> to vector<8x8x4xbf16>
    %9 = vector.shape_cast %8 : vector<8x8x4xbf16> to vector<64x4xbf16>
    %10 = arith.extf %9 : vector<64x4xbf16> to vector<64x4xf32>
    %c1_15 = arith.constant 1 : index
    %c0_16 = arith.constant 0 : index
    %c0_17 = arith.constant 0 : index
    %11 = vector.load %arg3[%c1_15, %c0_16, %c0_17] : memref<9x4x32xf32, #tpu.memory_space<vmem>>, vector<1x4x32xf32>
    %12 = vector.shape_cast %11 : vector<1x4x32xf32> to vector<4x32xf32>
    %cst_18 = arith.constant dense<0.000000e+00> : vector<64x32xf32>
    %13 = tpu.matmul %10, %12, %cst_18 {dimension_numbers = #tpu.dot_dimension_numbers<[1], [0], [0], [1], [0, 0, 1, 1], [], []>} : vector<64x4xf32>, vector<4x32xf32>, vector<64x32xf32> -> vector<64x32xf32>
    %14 = arith.addf %6, %13 : vector<64x32xf32>
    %c0_19 = arith.constant 0 : index
    %c0_20 = arith.constant 0 : index
    %c0_21 = arith.constant 0 : index
    %c0_22 = arith.constant 0 : index
    %c0_23 = arith.constant 0 : index
    %c1_24 = arith.constant 1 : index
    %c0_25 = arith.constant 0 : index
    %15 = vector.load %arg2[%c0_19, %c0_20, %c0_21, %c0_22, %c0_23, %c1_24, %c0_25] : memref<1x1x2x2x9x9x4xbf16, #tpu.memory_space<vmem>>, vector<1x1x1x1x8x8x4xbf16>
    %16 = vector.shape_cast %15 : vector<1x1x1x1x8x8x4xbf16> to vector<8x8x4xbf16>
    %17 = vector.shape_cast %16 : vector<8x8x4xbf16> to vector<64x4xbf16>
    %18 = arith.extf %17 : vector<64x4xbf16> to vector<64x4xf32>
    %c2 = arith.constant 2 : index
    %c0_26 = arith.constant 0 : index
    %c0_27 = arith.constant 0 : index
    %19 = vector.load %arg3[%c2, %c0_26, %c0_27] : memref<9x4x32xf32, #tpu.memory_space<vmem>>, vector<1x4x32xf32>
    %20 = vector.shape_cast %19 : vector<1x4x32xf32> to vector<4x32xf32>
    %cst_28 = arith.constant dense<0.000000e+00> : vector<64x32xf32>
    %21 = tpu.matmul %18, %20, %cst_28 {dimension_numbers = #tpu.dot_dimension_numbers<[1], [0], [0], [1], [0, 0, 1, 1], [], []>} : vector<64x4xf32>, vector<4x32xf32>, vector<64x32xf32> -> vector<64x32xf32>
    %22 = arith.addf %14, %21 : vector<64x32xf32>
    %c0_29 = arith.constant 0 : index
    %c0_30 = arith.constant 0 : index
    %c1_31 = arith.constant 1 : index
    %c0_32 = arith.constant 0 : index
    %c0_33 = arith.constant 0 : index
    %c0_34 = arith.constant 0 : index
    %c0_35 = arith.constant 0 : index
    %23 = vector.load %arg2[%c0_29, %c0_30, %c1_31, %c0_32, %c0_33, %c0_34, %c0_35] : memref<1x1x2x2x9x9x4xbf16, #tpu.memory_space<vmem>>, vector<1x1x1x1x8x8x4xbf16>
    %24 = vector.shape_cast %23 : vector<1x1x1x1x8x8x4xbf16> to vector<8x8x4xbf16>
    %25 = vector.shape_cast %24 : vector<8x8x4xbf16> to vector<64x4xbf16>
    %26 = arith.extf %25 : vector<64x4xbf16> to vector<64x4xf32>
    %c3 = arith.constant 3 : index
    %c0_36 = arith.constant 0 : index
    %c0_37 = arith.constant 0 : index
    %27 = vector.load %arg3[%c3, %c0_36, %c0_37] : memref<9x4x32xf32, #tpu.memory_space<vmem>>, vector<1x4x32xf32>
    %28 = vector.shape_cast %27 : vector<1x4x32xf32> to vector<4x32xf32>
    %cst_38 = arith.constant dense<0.000000e+00> : vector<64x32xf32>
    %29 = tpu.matmul %26, %28, %cst_38 {dimension_numbers = #tpu.dot_dimension_numbers<[1], [0], [0], [1], [0, 0, 1, 1], [], []>} : vector<64x4xf32>, vector<4x32xf32>, vector<64x32xf32> -> vector<64x32xf32>
    %30 = arith.addf %22, %29 : vector<64x32xf32>
    %c0_39 = arith.constant 0 : index
    %c0_40 = arith.constant 0 : index
    %c1_41 = arith.constant 1 : index
    %c1_42 = arith.constant 1 : index
    %c0_43 = arith.constant 0 : index
    %c0_44 = arith.constant 0 : index
    %c0_45 = arith.constant 0 : index
    %31 = vector.load %arg2[%c0_39, %c0_40, %c1_41, %c1_42, %c0_43, %c0_44, %c0_45] : memref<1x1x2x2x9x9x4xbf16, #tpu.memory_space<vmem>>, vector<1x1x1x1x8x8x4xbf16>
    %32 = vector.shape_cast %31 : vector<1x1x1x1x8x8x4xbf16> to vector<8x8x4xbf16>
    %33 = vector.shape_cast %32 : vector<8x8x4xbf16> to vector<64x4xbf16>
    %34 = arith.extf %33 : vector<64x4xbf16> to vector<64x4xf32>
    %c4 = arith.constant 4 : index
    %c0_46 = arith.constant 0 : index
    %c0_47 = arith.constant 0 : index
    %35 = vector.load %arg3[%c4, %c0_46, %c0_47] : memref<9x4x32xf32, #tpu.memory_space<vmem>>, vector<1x4x32xf32>
    %36 = vector.shape_cast %35 : vector<1x4x32xf32> to vector<4x32xf32>
    %cst_48 = arith.constant dense<0.000000e+00> : vector<64x32xf32>
    %37 = tpu.matmul %34, %36, %cst_48 {dimension_numbers = #tpu.dot_dimension_numbers<[1], [0], [0], [1], [0, 0, 1, 1], [], []>} : vector<64x4xf32>, vector<4x32xf32>, vector<64x32xf32> -> vector<64x32xf32>
    %38 = arith.addf %30, %37 : vector<64x32xf32>
    %c0_49 = arith.constant 0 : index
    %c0_50 = arith.constant 0 : index
    %c1_51 = arith.constant 1 : index
    %c0_52 = arith.constant 0 : index
    %c0_53 = arith.constant 0 : index
    %c1_54 = arith.constant 1 : index
    %c0_55 = arith.constant 0 : index
    %39 = vector.load %arg2[%c0_49, %c0_50, %c1_51, %c0_52, %c0_53, %c1_54, %c0_55] : memref<1x1x2x2x9x9x4xbf16, #tpu.memory_space<vmem>>, vector<1x1x1x1x8x8x4xbf16>
    %40 = vector.shape_cast %39 : vector<1x1x1x1x8x8x4xbf16> to vector<8x8x4xbf16>
    %41 = vector.shape_cast %40 : vector<8x8x4xbf16> to vector<64x4xbf16>
    %42 = arith.extf %41 : vector<64x4xbf16> to vector<64x4xf32>
    %c5 = arith.constant 5 : index
    %c0_56 = arith.constant 0 : index
    %c0_57 = arith.constant 0 : index
    %43 = vector.load %arg3[%c5, %c0_56, %c0_57] : memref<9x4x32xf32, #tpu.memory_space<vmem>>, vector<1x4x32xf32>
    %44 = vector.shape_cast %43 : vector<1x4x32xf32> to vector<4x32xf32>
    %cst_58 = arith.constant dense<0.000000e+00> : vector<64x32xf32>
    %45 = tpu.matmul %42, %44, %cst_58 {dimension_numbers = #tpu.dot_dimension_numbers<[1], [0], [0], [1], [0, 0, 1, 1], [], []>} : vector<64x4xf32>, vector<4x32xf32>, vector<64x32xf32> -> vector<64x32xf32>
    %46 = arith.addf %38, %45 : vector<64x32xf32>
    %c0_59 = arith.constant 0 : index
    %c0_60 = arith.constant 0 : index
    %c0_61 = arith.constant 0 : index
    %c0_62 = arith.constant 0 : index
    %c1_63 = arith.constant 1 : index
    %c0_64 = arith.constant 0 : index
    %c0_65 = arith.constant 0 : index
    %47 = vector.load %arg2[%c0_59, %c0_60, %c0_61, %c0_62, %c1_63, %c0_64, %c0_65] : memref<1x1x2x2x9x9x4xbf16, #tpu.memory_space<vmem>>, vector<1x1x1x1x8x8x4xbf16>
    %48 = vector.shape_cast %47 : vector<1x1x1x1x8x8x4xbf16> to vector<8x8x4xbf16>
    %49 = vector.shape_cast %48 : vector<8x8x4xbf16> to vector<64x4xbf16>
    %50 = arith.extf %49 : vector<64x4xbf16> to vector<64x4xf32>
    %c6 = arith.constant 6 : index
    %c0_66 = arith.constant 0 : index
    %c0_67 = arith.constant 0 : index
    %51 = vector.load %arg3[%c6, %c0_66, %c0_67] : memref<9x4x32xf32, #tpu.memory_space<vmem>>, vector<1x4x32xf32>
    %52 = vector.shape_cast %51 : vector<1x4x32xf32> to vector<4x32xf32>
    %cst_68 = arith.constant dense<0.000000e+00> : vector<64x32xf32>
    %53 = tpu.matmul %50, %52, %cst_68 {dimension_numbers = #tpu.dot_dimension_numbers<[1], [0], [0], [1], [0, 0, 1, 1], [], []>} : vector<64x4xf32>, vector<4x32xf32>, vector<64x32xf32> -> vector<64x32xf32>
    %54 = arith.addf %46, %53 : vector<64x32xf32>
    %c0_69 = arith.constant 0 : index
    %c0_70 = arith.constant 0 : index
    %c0_71 = arith.constant 0 : index
    %c1_72 = arith.constant 1 : index
    %c1_73 = arith.constant 1 : index
    %c0_74 = arith.constant 0 : index
    %c0_75 = arith.constant 0 : index
    %55 = vector.load %arg2[%c0_69, %c0_70, %c0_71, %c1_72, %c1_73, %c0_74, %c0_75] : memref<1x1x2x2x9x9x4xbf16, #tpu.memory_space<vmem>>, vector<1x1x1x1x8x8x4xbf16>
    %56 = vector.shape_cast %55 : vector<1x1x1x1x8x8x4xbf16> to vector<8x8x4xbf16>
    %57 = vector.shape_cast %56 : vector<8x8x4xbf16> to vector<64x4xbf16>
    %58 = arith.extf %57 : vector<64x4xbf16> to vector<64x4xf32>
    %c7 = arith.constant 7 : index
    %c0_76 = arith.constant 0 : index
    %c0_77 = arith.constant 0 : index
    %59 = vector.load %arg3[%c7, %c0_76, %c0_77] : memref<9x4x32xf32, #tpu.memory_space<vmem>>, vector<1x4x32xf32>
    %60 = vector.shape_cast %59 : vector<1x4x32xf32> to vector<4x32xf32>
    %cst_78 = arith.constant dense<0.000000e+00> : vector<64x32xf32>
    %61 = tpu.matmul %58, %60, %cst_78 {dimension_numbers = #tpu.dot_dimension_numbers<[1], [0], [0], [1], [0, 0, 1, 1], [], []>} : vector<64x4xf32>, vector<4x32xf32>, vector<64x32xf32> -> vector<64x32xf32>
    %62 = arith.addf %54, %61 : vector<64x32xf32>
    %c0_79 = arith.constant 0 : index
    %c0_80 = arith.constant 0 : index
    %c0_81 = arith.constant 0 : index
    %c0_82 = arith.constant 0 : index
    %c1_83 = arith.constant 1 : index
    %c1_84 = arith.constant 1 : index
    %c0_85 = arith.constant 0 : index
    %63 = vector.load %arg2[%c0_79, %c0_80, %c0_81, %c0_82, %c1_83, %c1_84, %c0_85] : memref<1x1x2x2x9x9x4xbf16, #tpu.memory_space<vmem>>, vector<1x1x1x1x8x8x4xbf16>
    %64 = vector.shape_cast %63 : vector<1x1x1x1x8x8x4xbf16> to vector<8x8x4xbf16>
    %65 = vector.shape_cast %64 : vector<8x8x4xbf16> to vector<64x4xbf16>
    %66 = arith.extf %65 : vector<64x4xbf16> to vector<64x4xf32>
    %c8 = arith.constant 8 : index
    %c0_86 = arith.constant 0 : index
    %c0_87 = arith.constant 0 : index
    %67 = vector.load %arg3[%c8, %c0_86, %c0_87] : memref<9x4x32xf32, #tpu.memory_space<vmem>>, vector<1x4x32xf32>
    %68 = vector.shape_cast %67 : vector<1x4x32xf32> to vector<4x32xf32>
    %cst_88 = arith.constant dense<0.000000e+00> : vector<64x32xf32>
    %69 = tpu.matmul %66, %68, %cst_88 {dimension_numbers = #tpu.dot_dimension_numbers<[1], [0], [0], [1], [0, 0, 1, 1], [], []>} : vector<64x4xf32>, vector<4x32xf32>, vector<64x32xf32> -> vector<64x32xf32>
    %70 = arith.addf %62, %69 : vector<64x32xf32>
    %c0_89 = arith.constant 0 : index
    %c0_90 = arith.constant 0 : index
    %71 = vector.load %arg4[%c0_89, %c0_90] : memref<1x32xf32, #tpu.memory_space<vmem>>, vector<1x32xf32>
    %72 = vector.broadcast %71 : vector<1x32xf32> to vector<64x32xf32>
    %73 = arith.addf %70, %72 : vector<64x32xf32>
    %74 = tpu.transpose %73, [1, 0] : vector<64x32xf32> -> vector<32x64xf32>
    %c0_91 = arith.constant 0 : index
    %c0_92 = arith.constant 0 : index
    %c0_93 = arith.constant 0 : index
    %75 = vector.load %arg5[%c0_91, %c0_92, %c0_93] : memref<1x32x64xf32, #tpu.memory_space<vmem>>, vector<1x32x64xf32>
    %76 = vector.shape_cast %75 : vector<1x32x64xf32> to vector<32x64xf32>
    %77 = vector.shape_cast %74 : vector<32x64xf32> to vector<1x32x64xf32>
    tpu.vector_store %arg5[%c0_91, %c0_92, %c0_93], %77 {strides = array<i32>} : memref<1x32x64xf32, #tpu.memory_space<vmem>>, vector<1x32x64xf32>,
    return
  }
  func.func @transform_0(%arg0: i32, %arg1: i32) -> (i32, i32, i32, i32, i32, i32, i32) {
    %c0_i32 = arith.constant 0 : i32
    %c0_i32_0 = arith.constant 0 : i32
    %c0_i32_1 = arith.constant 0 : i32
    %c0_i32_2 = arith.constant 0 : i32
    %c0_i32_3 = arith.constant 0 : i32
    %c0_i32_4 = arith.constant 0 : i32
    return %arg0, %arg1, %c0_i32, %c0_i32_0, %c0_i32_1, %c0_i32_2, %c0_i32_3 : i32, i32, i32, i32, i32, i32, i32
  }
  func.func @transform_1(%arg0: i32, %arg1: i32) -> (i32, i32, i32) {
    %c0_i32 = arith.constant 0 : i32
    %c0_i32_0 = arith.constant 0 : i32
    %c0_i32_1 = arith.constant 0 : i32
    %c0_i32_2 = arith.constant 0 : i32
    return %c0_i32, %c0_i32_0, %c0_i32_1 : i32, i32, i32
  }
  func.func @transform_2(%arg0: i32, %arg1: i32) -> (i32, i32) {
    %c0_i32 = arith.constant 0 : i32
    %c0_i32_0 = arith.constant 0 : i32
    %c0_i32_1 = arith.constant 0 : i32
    return %c0_i32, %c0_i32_0 : i32, i32
  }
  func.func @transform_3(%arg0: i32, %arg1: i32) -> (i32, i32, i32) {
    %c0_i32 = arith.constant 0 : i32
    %c0_i32_0 = arith.constant 0 : i32
    return %arg0, %c0_i32, %arg1 : i32, i32, i32
  }
}

</mosaic_0001>

<llo_original>
// kernel: tpu_custom_call.1
$region0: #{tpu_custom_call.1}
  #allocation0 [shape = 'u32[]', space=smem, size = 0x4, offset = 0x4, fixed_abs, tag = 'smem constant byte address 0x4 - core index']
  #allocation1 [shape = 'u32[144,128]{1,0:T(1,128)}', space=vmem, size = 0x12000, scoped, tag = 'internal scratch']
  %s0 = inlined_call_operand.vmem [shape: bf16[2,1,2,2,9,9,4], index: 0, kind: input, shape index: {}]
  %s1 = inlined_call_operand.vmem [shape: f32[9,4,32], index: 1, kind: input, shape index: {}]
  %s2 = inlined_call_operand.vmem [shape: f32[1,32], index: 2, kind: input, shape index: {}]
  %s3 = inlined_call_operand.hbm [shape: f32[2,32,64], index: 3, kind: output, shape index: {}]
  %s4 = sld [smem:[#allocation0]]
  $region45: #{tpu_custom_call.1} parent=0
    _
  %s6 = ssub.s32 1, %s4
  %s7 = scalar_select 0, %s6, %s4
  $region1: #{tpu_custom_call.1} parent=0
    #allocation2 [shape = 'u8[32768]{0}', space=vmem, size = 0x8000, scoped, tag = 'output window, operand 0']
    #allocation3 [shape = 's32[2]{0}', space=sflag, size = 0x8, scoped, tag = 'scoped memory for tpu_custom_call.1']
    %8 = vsyncpa [#allocation3], 0
    %s9 = scalar_lea.sflag [#allocation3], 1
    %10 = vsyncpa %s9, 0
    loop: start=0, step=1, limit=4
    $region2: #{tpu_custom_call.1} parent=1 // loop_pre_header
      _
    $region3: #{tpu_custom_call.1} parent=1 // loop_header
      %s12 = sphi 0, %s16
      %p13 = scmp.ge.s32.totalorder %s12, 4
      %s19 = sphi 0, %s31
      %s20 = sphi 0, %s27
      %s21 = sphi 0, %s19
      %s22 = sphi 0, %s20
      %s23 = sphi 0, %s21
      %s24 = sphi 0, %s22
      %s36 = sphi 0, %s38
      %s39 = sphi 0, %s36
      %s40 = sphi 0, %s39
      %s56 = sphi 0, %s40
      %s60 = sphi 0, %s60
      %s62 = sphi 0, %s60
      %s63 = sphi 0, %s62
      %s77 = sphi 0, %s63
      %s81 = sphi 0, %s81
      %s83 = sphi 0, %s81
      %s84 = sphi 0, %s83
      %s98 = sphi 0, %s84
      %s106 = sphi 0, %s108
      %s109 = sphi 0, %s106
      %s110 = sphi 0, %s109
      %s126 = sphi 0, %s110
    $region4: #{tpu_custom_call.1} parent=1 // loop_header_branch
      %15 = sbr.rel (%p13) target = $region8
    $region5: #{tpu_custom_call.1} parent=1 // loop_body
      %s17 = ssub.s32 %s12, 1
      %s18 = ssub.s32 %s12, 2
      %s25 = sadd.s32 1, %s20
      %p26 = scmp.ge.s32.totalorder %s25, 1
      %s27 = scalar_select %p26, 0, %s25
      %s28 = sadd.s32 1, %s19
      %s29 = scalar_select %p26, %s28, %s19
      %p30 = scmp.ge.s32.totalorder %s29, 2
      %s31 = scalar_select %p30, 0, %s29
      %s32 = ssub.s32 %s19, %s31
      %s33 = ssub.s32 %s20, %s27
      %s34 = sor.u32 %s32, %s33
      %p35 = scmp.eq.s32.totalorder %s34, 0
      %s37 = sadd.s32 %s36, 1
      %s38 = scalar_select %p35, %s36, %s37
      %p41 = pneg %p35
      %p42 = scmp.eq.s32.totalorder %s12, 1
      %p43 = por %p41, %p42
      %p44 = scmp.ne.s32.totalorder %s36, %s39
      %p45 = scmp.eq.s32.totalorder %s12, 0
      %p46 = por %p44, %p45
      %p47 = scmp.ne.s32.totalorder %s36, %s39
      %p48 = scmp.eq.s32.totalorder %s17, 1
      %p49 = por %p47, %p48
      %p50 = scmp.ne.s32.totalorder %s39, %s40
      %p51 = scmp.eq.s32.totalorder %s17, 0
      %p52 = por %p50, %p51
      %p53 = scmp.ne.s32.totalorder %s39, %s40
      %p54 = scmp.eq.s32.totalorder %s18, 1
      %p55 = por %p53, %p54
      %p57 = scmp.ne.s32.totalorder %s40, %s56
      %p58 = scmp.eq.s32.totalorder %s18, 0
      %p59 = por %p57, %p58
      %s61 = sadd.s32 %s60, 1
      %p64 = scmp.eq.s32.totalorder %s12, 1
      %p65 = scmp.ne.s32.totalorder %s60, %s62
      %p66 = scmp.eq.s32.totalorder %s12, 0
      %p67 = por %p65, %p66
      %p68 = scmp.ne.s32.totalorder %s60, %s62
      %p69 = scmp.eq.s32.totalorder %s17, 1
      %p70 = por %p68, %p69
      %p71 = scmp.ne.s32.totalorder %s62, %s63
      %p72 = scmp.eq.s32.totalorder %s17, 0
      %p73 = por %p71, %p72
      %p74 = scmp.ne.s32.totalorder %s62, %s63
      %p75 = scmp.eq.s32.totalorder %s18, 1
      %p76 = por %p74, %p75
      %p78 = scmp.ne.s32.totalorder %s63, %s77
      %p79 = scmp.eq.s32.totalorder %s18, 0
      %p80 = por %p78, %p79
      %s82 = sadd.s32 %s81, 1
      %p85 = scmp.eq.s32.totalorder %s12, 1
      %p86 = scmp.ne.s32.totalorder %s81, %s83
      %p87 = scmp.eq.s32.totalorder %s12, 0
      %p88 = por %p86, %p87
      %p89 = scmp.ne.s32.totalorder %s81, %s83
      %p90 = scmp.eq.s32.totalorder %s17, 1
      %p91 = por %p89, %p90
      %p92 = scmp.ne.s32.totalorder %s83, %s84
      %p93 = scmp.eq.s32.totalorder %s17, 0
      %p94 = por %p92, %p93
      %p95 = scmp.ne.s32.totalorder %s83, %s84
      %p96 = scmp.eq.s32.totalorder %s18, 1
      %p97 = por %p95, %p96
      %p99 = scmp.ne.s32.totalorder %s84, %s98
      %p100 = scmp.eq.s32.totalorder %s18, 0
      %p101 = por %p99, %p100
      %s102 = ssub.s32 %s19, %s31
      %s103 = ssub.s32 %s20, %s27
      %s104 = sor.u32 %s102, %s103
      %p105 = scmp.eq.s32.totalorder %s104, 0
      %s107 = sadd.s32 %s106, 1
      %s108 = scalar_select %p105, %s106, %s107
      %p111 = pneg %p105
      %p112 = scmp.eq.s32.totalorder %s12, 1
      %p113 = por %p111, %p112
      %p114 = scmp.ne.s32.totalorder %s106, %s109
      %p115 = scmp.eq.s32.totalorder %s12, 0
      %p116 = por %p114, %p115
      %p117 = scmp.ne.s32.totalorder %s106, %s109
      %p118 = scmp.eq.s32.totalorder %s17, 1
      %p119 = por %p117, %p118
      %p120 = scmp.ne.s32.totalorder %s109, %s110
      %p121 = scmp.eq.s32.totalorder %s17, 0
      %p122 = por %p120, %p121
      %p123 = scmp.ne.s32.totalorder %s109, %s110
      %p124 = scmp.eq.s32.totalorder %s18, 1
      %p125 = por %p123, %p124
      %p127 = scmp.ne.s32.totalorder %s110, %s126
      %p128 = scmp.eq.s32.totalorder %s18, 0
      %p129 = por %p127, %p128
      %p130 = scmp.le.s32.totalorder 1, %s12
      %p131 = scmp.lt.s32.totalorder %s12, 3
      %p132 = pnand %p130, %p131
      %p133 = pneg %p132
      // Predicated region
      $region9: #{tpu_custom_call.1} parent=5 // pred_check
        _
      $region10: #{tpu_custom_call.1} parent=5 // pred_check_branch
        %135 = sbr.rel (%p132) target = $region12
      $region11: #{tpu_custom_call.1} parent=5 // pred_region
        %s136 = ssub.s32 %s12, 1
        // Predicated region
        $region13: #{tpu_custom_call.1} parent=11 // pred_check
          %p137 = pneg %p73
        $region14: #{tpu_custom_call.1} parent=11 // pred_check_branch
          %139 = sbr.rel (%p137) target = $region16
        $region15: #{tpu_custom_call.1} parent=11 // pred_region
          _
        $region16: #{tpu_custom_call.1} parent=11 // pred_fallthru
          _
        // Predicated region
        $region17: #{tpu_custom_call.1} parent=11 // pred_check
          %p140 = pneg %p94
        $region18: #{tpu_custom_call.1} parent=11 // pred_check_branch
          %142 = sbr.rel (%p140) target = $region20
        $region19: #{tpu_custom_call.1} parent=11 // pred_region
          _
        $region20: #{tpu_custom_call.1} parent=11 // pred_fallthru
          _
      $region12: #{tpu_custom_call.1} parent=5 // pred_fallthru
        _
      %p143 = scmp.lt.s32.totalorder %s12, 2
      // Predicated region
      $region21: #{tpu_custom_call.1} parent=5 // pred_check
        %p144 = pneg %p143
      $region22: #{tpu_custom_call.1} parent=5 // pred_check_branch
        %146 = sbr.rel (%p144) target = $region24
      $region23: #{tpu_custom_call.1} parent=5 // pred_region
        // Predicated region
        $region25: #{tpu_custom_call.1} parent=23 // pred_check
          %p147 = pneg %p46
        $region26: #{tpu_custom_call.1} parent=23 // pred_check_branch
          %149 = sbr.rel (%p147) target = $region28
        $region27: #{tpu_custom_call.1} parent=23 // pred_region
          %p150 = scmp.lt.s32.totalorder %s19, 1
          %s151 = scalar_select %p150, %s19, 1
          %p152 = scmp.lt.s32.totalorder %s20, 0
          %s153 = scalar_select %p152, %s20, 0
          %s154 = smul.addr %s153, 72
          %s155 = smul.addr %s151, 72
          %s156 = sadd.s32 %s154, %s155
          %s157 = smul.addr %s156, 4
          %s158 = scalar_lea.vmem %s0, %s157
        $region28: #{tpu_custom_call.1} parent=23 // pred_fallthru
          _
      $region24: #{tpu_custom_call.1} parent=5 // pred_fallthru
        _
      %p159 = scmp.le.s32.totalorder 1, %s12
      %p160 = scmp.lt.s32.totalorder %s12, 3
      %p161 = pnand %p159, %p160
      %p162 = pneg %p161
      // Predicated region
      $region29: #{tpu_custom_call.1} parent=5 // pred_check
        _
      $region30: #{tpu_custom_call.1} parent=5 // pred_check_branch
        %164 = sbr.rel (%p161) target = $region32
      $region31: #{tpu_custom_call.1} parent=5 // pred_region
        %s165 = ssub.s32 %s12, 1
        %p166 = scmp.lt.s32.totalorder %s21, 1
        %s167 = scalar_select %p166, %s21, 1
        %p168 = scmp.lt.s32.totalorder %s22, 0
        %s169 = scalar_select %p168, %s22, 0
        %s170 = smul.addr %s169, 72
        %s171 = smul.addr %s167, 72
        %s172 = sadd.s32 %s170, %s171
        %s173 = smul.addr %s172, 4
        %s174 = scalar_lea.vmem %s0, %s173
        %p175 = pneg %p52
        %p176 = pneg %p49
        %p177 = pneg %p73
        %p178 = pneg %p70
        %p179 = pneg %p94
        %p180 = pneg %p91
        %p181 = pneg %p122
        %p182 = pneg %p119
        %s183 = sand.u32 %s109, 1
        %s184 = scalar_lea.sflag [#allocation3], %s183
        %s185 = sand.u32 %s109, 1
        %s186 = smul.addr %s185, 32
        %s187 = scalar_lea.vmem [#allocation2], %s186
        %p188 = scmp.lt.s32.totalorder %s21, 1
        %s189 = scalar_select %p188, %s21, 1
        %p190 = scmp.lt.s32.totalorder %s22, 0
        %s191 = scalar_select %p190, %s22, 0
        %s192 = smul.addr %s191, 72
        %s193 = smul.addr %s189, 72
        %s194 = sadd.s32 %s192, %s193
        %s195 = smul.addr %s194, 4
        %s196 = scalar_lea.vmem %s0, %s195
        %v197 = vld [vmem:[%s196] sm:$0xf]
        %v198 = vld [vmem:[%s196 + $0x8] sm:$0xf]
        %v199 = vld [vmem:[%s196 + $0x10] sm:$0xf]
        %v200 = vld [vmem:[%s196 + $0x18] sm:$0xf]
        %v201 = vld [vmem:[%s196 + $0x20] sm:$0xf]
        %v202 = vld [vmem:[%s196 + $0x28] sm:$0xf]
        %v203 = vld [vmem:[%s196 + $0x30] sm:$0xf]
        %v204 = vld [vmem:[%s196 + $0x38] sm:$0xf]
        %v205 = vunpack.c.l.bf16 %v197
        %v206 = vunpack.c.l.bf16 %v198
        %v207 = vunpack.c.l.bf16 %v199
        %v208 = vunpack.c.l.bf16 %v200
        %v209 = vunpack.c.l.bf16 %v201
        %v210 = vunpack.c.l.bf16 %v202
        %v211 = vunpack.c.l.bf16 %v203
        %v212 = vunpack.c.l.bf16 %v204
        %v213 = vld [vmem:[%s1] sm:$0xf]
        %s214 = scalar_lea.vmem %s196, 72
        %v215 = vld [vmem:[%s214] sm:$0xf]
        %v216 = vld [vmem:[%s214 + $0x8] sm:$0xf]
        %v217 = vld [vmem:[%s214 + $0x10] sm:$0xf]
        %v218 = vld [vmem:[%s214 + $0x18] sm:$0xf]
        %v219 = vld [vmem:[%s214 + $0x20] sm:$0xf]
        %v220 = vld [vmem:[%s214 + $0x28] sm:$0xf]
        %v221 = vld [vmem:[%s214 + $0x30] sm:$0xf]
        %v222 = vld [vmem:[%s214 + $0x38] sm:$0xf]
        %v223 = vunpack.c.l.bf16 %v215
        %v224 = vunpack.c.l.bf16 %v216
        %v225 = vunpack.c.l.bf16 %v217
        %v226 = vunpack.c.l.bf16 %v218
        %v227 = vunpack.c.l.bf16 %v219
        %v228 = vunpack.c.l.bf16 %v220
        %v229 = vunpack.c.l.bf16 %v221
        %v230 = vunpack.c.l.bf16 %v222
        %s231 = scalar_lea.vmem %s1, 4
        %v232 = vld [vmem:[%s231] sm:$0xf]
        %vm233 = vcmask 31744
        %v235 = vsel %vm233, %v223, 0
        %v238 = vsel %vm233, %v224, 0
        %v241 = vsel %vm233, %v225, 0
        %v244 = vsel %vm233, %v226, 0
        %v247 = vsel %vm233, %v227, 0
        %v250 = vsel %vm233, %v228, 0
        %v253 = vsel %vm233, %v229, 0
        %v256 = vsel %vm233, %v230, 0
        %vm258 = vcmask 1043456
        %v260 = vsel %vm258, %v232, 0
        %262 = vmatprep.subr.mxu0 0.0
        %263 = vmatpush1.msra.mxu0 %v260
        %264 = vmatprep.subr.mxu0 0.0
        %265 = vmatpush1.msra.mxu0 0.0
        %266 = vmatprep.subr.mxu0 0.0
        %267 = vmatpush1.msra.mxu0 0.0
        %268 = vmatprep.subr.mxu0 0.0
        %269 = vmatpush1.msra.mxu0 0.0
        %270 = vmatprep.subr.mxu0 0.0
        %271 = vmatpush1.msra.mxu0 0.0
        %272 = vmatprep.subr.mxu0 0.0
        %273 = vmatpush1.msra.mxu0 0.0
        %274 = vmatprep.subr.mxu0 0.0
        %275 = vmatpush1.msra.mxu0 0.0
        %276 = vmatprep.subr.mxu0 0.0
        %277 = vmatpush1.msra.mxu0 0.0
        %278 = vmatprep.subr.mxu0 0.0
        %279 = vmatpush1.msra.mxu0 0.0
        %280 = vmatprep.subr.mxu0 0.0
        %281 = vmatpush1.msra.mxu0 0.0
        %282 = vmatprep.subr.mxu0 0.0
        %283 = vmatpush1.msra.mxu0 0.0
        %284 = vmatprep.subr.mxu0 0.0
        %285 = vmatpush1.msra.mxu0 0.0
        %286 = vmatprep.subr.mxu0 0.0
        %287 = vmatpush1.msra.mxu0 0.0
        %288 = vmatprep.subr.mxu0 0.0
        %289 = vmatpush1.msra.mxu0 0.0
        %290 = vmatprep.subr.mxu0 0.0
        %291 = vmatpush1.msra.mxu0 0.0
        %292 = vmatprep.subr.mxu0 0.0
        %293 = vmatpush1.msra.mxu0 0.0
        %294 = vmatprep.subr.mxu0 0.0
        %295 = vmatpush1.msra.mxu0 0.0
        %296 = vmatprep.subr.mxu0 0.0
        %297 = vmatpush1.msra.mxu0 0.0
        %298 = vmatprep.subr.mxu0 0.0
        %299 = vmatpush1.msra.mxu0 0.0
        %300 = vmatprep.subr.mxu0 0.0
        %301 = vmatpush1.msra.mxu0 0.0
        %302 = vmatprep.subr.mxu0 0.0
        %303 = vmatpush1.msra.mxu0 0.0
        %304 = vmatprep.subr.mxu0 0.0
        %305 = vmatpush1.msra.mxu0 0.0
        %306 = vmatprep.subr.mxu0 0.0
        %307 = vmatpush1.msra.mxu0 0.0
        %308 = vmatprep.subr.mxu0 0.0
        %309 = vmatpush1.msra.mxu0 0.0
        %310 = vmatprep.subr.mxu0 0.0
        %311 = vmatpush1.msra.mxu0 0.0
        %312 = vmatprep.subr.mxu0 0.0
        %313 = vmatpush1.msra.mxu0 0.0
        %314 = vmatprep.subr.mxu0 0.0
        %315 = vmatpush1.msra.mxu0 0.0
        %316 = vmatprep.subr.mxu0 0.0
        %317 = vmatpush1.msra.mxu0 0.0
        %318 = vmatprep.subr.mxu0 0.0
        %319 = vmatpush1.msra.mxu0 0.0
        %320 = vmatprep.subr.mxu0 0.0
        %321 = vmatpush1.msra.mxu0 0.0
        %322 = vmatprep.subr.mxu0 0.0
        %323 = vmatpush1.msra.mxu0 0.0
        %324 = vmatprep.subr.mxu0 0.0
        %325 = vmatpush1.msra.mxu0 0.0
        %326 = vmatprep.mubr.f32.mxu0 0.0
        %327 = vmatmul.mubr.f32.gmra.mrb[0].mxu0 %v235
        %v328 = vpop.f32.mrb[0].mxu0
        %v329 = vadd.f32 0.0, %v328
        %v330 = vpop.f32.mrb[0].mxu0
        %331 = vmatprep.mubr.f32.mxu0 0.0
        %332 = vmatmul.mubr.f32.gmra.mrb[0].mxu0 %v238
        %v333 = vpop.f32.mrb[0].mxu0
        %v334 = vadd.f32 0.0, %v333
        %v335 = vpop.f32.mrb[0].mxu0
        %336 = vmatprep.mubr.f32.mxu0 0.0
        %337 = vmatmul.mubr.f32.gmra.mrb[0].mxu0 %v241
        %v338 = vpop.f32.mrb[0].mxu0
        %v339 = vadd.f32 0.0, %v338
        %v340 = vpop.f32.mrb[0].mxu0
        %341 = vmatprep.mubr.f32.mxu0 0.0
        %342 = vmatmul.mubr.f32.gmra.mrb[0].mxu0 %v244
        %v343 = vpop.f32.mrb[0].mxu0
        %v344 = vadd.f32 0.0, %v343
        %v345 = vpop.f32.mrb[0].mxu0
        %346 = vmatprep.mubr.f32.mxu0 0.0
        %347 = vmatmul.mubr.f32.gmra.mrb[0].mxu0 %v247
        %v348 = vpop.f32.mrb[0].mxu0
        %v349 = vadd.f32 0.0, %v348
        %v350 = vpop.f32.mrb[0].mxu0
        %351 = vmatprep.mubr.f32.mxu0 0.0
        %352 = vmatmul.mubr.f32.gmra.mrb[0].mxu0 %v250
        %v353 = vpop.f32.mrb[0].mxu0
        %v354 = vadd.f32 0.0, %v353
        %v355 = vpop.f32.mrb[0].mxu0
        %356 = vmatprep.mubr.f32.mxu0 0.0
        %357 = vmatmul.mubr.f32.gmra.mrb[0].mxu0 %v253
        %v358 = vpop.f32.mrb[0].mxu0
        %v359 = vadd.f32 0.0, %v358
        %v360 = vpop.f32.mrb[0].mxu0
        %361 = vmatprep.mubr.f32.mxu0 0.0
        %362 = vmatmul.mubr.f32.gmra.mrb[0].mxu0 %v256
        %v363 = vpop.f32.mrb[0].mxu0
        %v364 = vadd.f32 0.0, %v363
        %v365 = vpop.f32.mrb[0].mxu0
        %366 = vdwg.mxu0
        %v368 = vsel %vm233, %v205, 0
        %v371 = vsel %vm233, %v206, 0
        %v374 = vsel %vm233, %v207, 0
        %v377 = vsel %vm233, %v208, 0
        %v380 = vsel %vm233, %v209, 0
        %v383 = vsel %vm233, %v210, 0
        %v386 = vsel %vm233, %v211, 0
        %v389 = vsel %vm233, %v212, 0
        %v392 = vsel %vm258, %v213, 0
        %394 = vmatprep.subr.mxu0 0.0
        %395 = vmatpush1.msra.mxu0 %v392
        %396 = vmatprep.subr.mxu0 0.0
        %397 = vmatpush1.msra.mxu0 0.0
        %398 = vmatprep.subr.mxu0 0.0
        %399 = vmatpush1.msra.mxu0 0.0
        %400 = vmatprep.subr.mxu0 0.0
        %401 = vmatpush1.msra.mxu0 0.0
        %402 = vmatprep.subr.mxu0 0.0
        %403 = vmatpush1.msra.mxu0 0.0
        %404 = vmatprep.subr.mxu0 0.0
        %405 = vmatpush1.msra.mxu0 0.0
        %406 = vmatprep.subr.mxu0 0.0
        %407 = vmatpush1.msra.mxu0 0.0
        %408 = vmatprep.subr.mxu0 0.0
        %409 = vmatpush1.msra.mxu0 0.0
        %410 = vmatprep.subr.mxu0 0.0
        %411 = vmatpush1.msra.mxu0 0.0
        %412 = vmatprep.subr.mxu0 0.0
        %413 = vmatpush1.msra.mxu0 0.0
        %414 = vmatprep.subr.mxu0 0.0
        %415 = vmatpush1.msra.mxu0 0.0
        %416 = vmatprep.subr.mxu0 0.0
        %417 = vmatpush1.msra.mxu0 0.0
        %418 = vmatprep.subr.mxu0 0.0
        %419 = vmatpush1.msra.mxu0 0.0
        %420 = vmatprep.subr.mxu0 0.0
        %421 = vmatpush1.msra.mxu0 0.0
        %422 = vmatprep.subr.mxu0 0.0
        %423 = vmatpush1.msra.mxu0 0.0
        %424 = vmatprep.subr.mxu0 0.0
        %425 = vmatpush1.msra.mxu0 0.0
        %426 = vmatprep.subr.mxu0 0.0
        %427 = vmatpush1.msra.mxu0 0.0
        %428 = vmatprep.subr.mxu0 0.0
        %429 = vmatpush1.msra.mxu0 0.0
        %430 = vmatprep.subr.mxu0 0.0
        %431 = vmatpush1.msra.mxu0 0.0
        %432 = vmatprep.subr.mxu0 0.0
        %433 = vmatpush1.msra.mxu0 0.0
        %434 = vmatprep.subr.mxu0 0.0
        %435 = vmatpush1.msra.mxu0 0.0
        %436 = vmatprep.subr.mxu0 0.0
        %437 = vmatpush1.msra.mxu0 0.0
        %438 = vmatprep.subr.mxu0 0.0
        %439 = vmatpush1.msra.mxu0 0.0
        %440 = vmatprep.subr.mxu0 0.0
        %441 = vmatpush1.msra.mxu0 0.0
        %442 = vmatprep.subr.mxu0 0.0
        %443 = vmatpush1.msra.mxu0 0.0
        %444 = vmatprep.subr.mxu0 0.0
        %445 = vmatpush1.msra.mxu0 0.0
        %446 = vmatprep.subr.mxu0 0.0
        %447 = vmatpush1.msra.mxu0 0.0
        %448 = vmatprep.subr.mxu0 0.0
        %449 = vmatpush1.msra.mxu0 0.0
        %450 = vmatprep.subr.mxu0 0.0
        %451 = vmatpush1.msra.mxu0 0.0
        %452 = vmatprep.subr.mxu0 0.0
        %453 = vmatpush1.msra.mxu0 0.0
        %454 = vmatprep.subr.mxu0 0.0
        %455 = vmatpush1.msra.mxu0 0.0
        %456 = vmatprep.subr.mxu0 0.0
        %457 = vmatpush1.msra.mxu0 0.0
        %458 = vmatprep.mubr.f32.mxu0 0.0
        %459 = vmatmul.mubr.f32.gmra.mrb[0].mxu0 %v368
        %v460 = vpop.f32.mrb[0].mxu0
        %v461 = vadd.f32 %v329, %v460
        %v462 = vpop.f32.mrb[0].mxu0
        %463 = vmatprep.mubr.f32.mxu0 0.0
        %464 = vmatmul.mubr.f32.gmra.mrb[0].mxu0 %v371
        %v465 = vpop.f32.mrb[0].mxu0
        %v466 = vadd.f32 %v334, %v465
        %v467 = vpop.f32.mrb[0].mxu0
        %468 = vmatprep.mubr.f32.mxu0 0.0
        %469 = vmatmul.mubr.f32.gmra.mrb[0].mxu0 %v374
        %v470 = vpop.f32.mrb[0].mxu0
        %v471 = vadd.f32 %v339, %v470
        %v472 = vpop.f32.mrb[0].mxu0
        %473 = vmatprep.mubr.f32.mxu0 0.0
        %474 = vmatmul.mubr.f32.gmra.mrb[0].mxu0 %v377
        %v475 = vpop.f32.mrb[0].mxu0
        %v476 = vadd.f32 %v344, %v475
        %v477 = vpop.f32.mrb[0].mxu0
        %478 = vmatprep.mubr.f32.mxu0 0.0
        %479 = vmatmul.mubr.f32.gmra.mrb[0].mxu0 %v380
        %v480 = vpop.f32.mrb[0].mxu0
        %v481 = vadd.f32 %v349, %v480
        %v482 = vpop.f32.mrb[0].mxu0
        %483 = vmatprep.mubr.f32.mxu0 0.0
        %484 = vmatmul.mubr.f32.gmra.mrb[0].mxu0 %v383
        %v485 = vpop.f32.mrb[0].mxu0
        %v486 = vadd.f32 %v354, %v485
        %v487 = vpop.f32.mrb[0].mxu0
        %488 = vmatprep.mubr.f32.mxu0 0.0
        %489 = vmatmul.mubr.f32.gmra.mrb[0].mxu0 %v386
        %v490 = vpop.f32.mrb[0].mxu0
        %v491 = vadd.f32 %v359, %v490
        %v492 = vpop.f32.mrb[0].mxu0
        %493 = vmatprep.mubr.f32.mxu0 0.0
        %494 = vmatmul.mubr.f32.gmra.mrb[0].mxu0 %v389
        %v495 = vpop.f32.mrb[0].mxu0
        %v496 = vadd.f32 %v364, %v495
        %v497 = vpop.f32.mrb[0].mxu0
        %498 = vdwg.mxu0
        %v499 = vld [vmem:[%s196] sm:$0xf]
        %v500 = vld [vmem:[%s196 + $0x4] sm:$0x1]
        %v501 = vld [vmem:[%s196 + $0x8] sm:$0xf]
        %v502 = vld [vmem:[%s196 + $0xc] sm:$0x1]
        %v503 = vld [vmem:[%s196 + $0x10] sm:$0xf]
        %v504 = vld [vmem:[%s196 + $0x14] sm:$0x1]
        %v505 = vld [vmem:[%s196 + $0x18] sm:$0xf]
        %v506 = vld [vmem:[%s196 + $0x1c] sm:$0x1]
        %v507 = vld [vmem:[%s196 + $0x20] sm:$0xf]
        %v508 = vld [vmem:[%s196 + $0x24] sm:$0x1]
        %v509 = vld [vmem:[%s196 + $0x28] sm:$0xf]
        %v510 = vld [vmem:[%s196 + $0x2c] sm:$0x1]
        %v511 = vld [vmem:[%s196 + $0x30] sm:$0xf]
        %v512 = vld [vmem:[%s196 + $0x34] sm:$0x1]
        %v513 = vld [vmem:[%s196 + $0x38] sm:$0xf]
        %v514 = vld [vmem:[%s196 + $0x3c] sm:$0x1]
        %vm515 = vsmask.f32 3328
        %vm516 = vsmask.f32 7440
        %vm517 = vmor %vm515, %vm516
        %v519 = vshrl.u32 %v499, 16
        %v521 = vrot.slane %v519, 4
        %v522 = vshll.u32 %v499, 16
        %v524 = vrot.slane %v522, 5
        %v525 = vor.u32 %v521, %v524
        %v526 = vrot.slane %v525, 4
        %v528 = vshll.u32 %v500, 16
        %v530 = vrot.slane %v528, 5
        %v531 = vsel %vm517, %v526, %v530
        %v533 = vshrl.u32 %v501, 16
        %v535 = vrot.slane %v533, 4
        %v536 = vshll.u32 %v501, 16
        %v538 = vrot.slane %v536, 5
        %v539 = vor.u32 %v535, %v538
        %v540 = vrot.slane %v539, 4
        %v542 = vshll.u32 %v502, 16
        %v544 = vrot.slane %v542, 5
        %v545 = vsel %vm517, %v540, %v544
        %v547 = vshrl.u32 %v503, 16
        %v549 = vrot.slane %v547, 4
        %v550 = vshll.u32 %v503, 16
        %v552 = vrot.slane %v550, 5
        %v553 = vor.u32 %v549, %v552
        %v554 = vrot.slane %v553, 4
        %v556 = vshll.u32 %v504, 16
        %v558 = vrot.slane %v556, 5
        %v559 = vsel %vm517, %v554, %v558
        %v561 = vshrl.u32 %v505, 16
        %v563 = vrot.slane %v561, 4
        %v564 = vshll.u32 %v505, 16
        %v566 = vrot.slane %v564, 5
        %v567 = vor.u32 %v563, %v566
        %v568 = vrot.slane %v567, 4
        %v570 = vshll.u32 %v506, 16
        %v572 = vrot.slane %v570, 5
        %v573 = vsel %vm517, %v568, %v572
        %v575 = vshrl.u32 %v507, 16
        %v577 = vrot.slane %v575, 4
        %v578 = vshll.u32 %v507, 16
        %v580 = vrot.slane %v578, 5
        %v581 = vor.u32 %v577, %v580
        %v582 = vrot.slane %v581, 4
        %v584 = vshll.u32 %v508, 16
        %v586 = vrot.slane %v584, 5
        %v587 = vsel %vm517, %v582, %v586
        %v589 = vshrl.u32 %v509, 16
        %v591 = vrot.slane %v589, 4
        %v592 = vshll.u32 %v509, 16
        %v594 = vrot.slane %v592, 5
        %v595 = vor.u32 %v591, %v594
        %v596 = vrot.slane %v595, 4
        %v598 = vshll.u32 %v510, 16
        %v600 = vrot.slane %v598, 5
        %v601 = vsel %vm517, %v596, %v600
        %v603 = vshrl.u32 %v511, 16
        %v605 = vrot.slane %v603, 4
        %v606 = vshll.u32 %v511, 16
        %v608 = vrot.slane %v606, 5
        %v609 = vor.u32 %v605, %v608
        %v610 = vrot.slane %v609, 4
        %v612 = vshll.u32 %v512, 16
        %v614 = vrot.slane %v612, 5
        %v615 = vsel %vm517, %v610, %v614
        %v617 = vshrl.u32 %v513, 16
        %v619 = vrot.slane %v617, 4
        %v620 = vshll.u32 %v513, 16
        %v622 = vrot.slane %v620, 5
        %v623 = vor.u32 %v619, %v622
        %v624 = vrot.slane %v623, 4
        %v626 = vshll.u32 %v514, 16
        %v628 = vrot.slane %v626, 5
        %v629 = vsel %vm517, %v624, %v628
        %v638 = vunpack.c.l.bf16 %v531
        %v639 = vunpack.c.l.bf16 %v545
        %v640 = vunpack.c.l.bf16 %v559
        %v641 = vunpack.c.l.bf16 %v573
        %v642 = vunpack.c.l.bf16 %v587
        %v643 = vunpack.c.l.bf16 %v601
        %v644 = vunpack.c.l.bf16 %v615
        %v645 = vunpack.c.l.bf16 %v629
        %s646 = scalar_lea.vmem %s1, 8
        %v647 = vld [vmem:[%s646] sm:$0xf]
        %v649 = vsel %vm233, %v638, 0
        %v652 = vsel %vm233, %v639, 0
        %v655 = vsel %vm233, %v640, 0
        %v658 = vsel %vm233, %v641, 0
        %v661 = vsel %vm233, %v642, 0
        %v664 = vsel %vm233, %v643, 0
        %v667 = vsel %vm233, %v644, 0
        %v670 = vsel %vm233, %v645, 0
        %v673 = vsel %vm258, %v647, 0
        %675 = vmatprep.subr.mxu0 0.0
        %676 = vmatpush1.msra.mxu0 %v673
        %677 = vmatprep.subr.mxu0 0.0
        %678 = vmatpush1.msra.mxu0 0.0
        %679 = vmatprep.subr.mxu0 0.0
        %680 = vmatpush1.msra.mxu0 0.0
        %681 = vmatprep.subr.mxu0 0.0
        %682 = vmatpush1.msra.mxu0 0.0
        %683 = vmatprep.subr.mxu0 0.0
        %684 = vmatpush1.msra.mxu0 0.0
        %685 = vmatprep.subr.mxu0 0.0
        %686 = vmatpush1.msra.mxu0 0.0
        %687 = vmatprep.subr.mxu0 0.0
        %688 = vmatpush1.msra.mxu0 0.0
        %689 = vmatprep.subr.mxu0 0.0
        %690 = vmatpush1.msra.mxu0 0.0
        %691 = vmatprep.subr.mxu0 0.0
        %692 = vmatpush1.msra.mxu0 0.0
        %693 = vmatprep.subr.mxu0 0.0
        %694 = vmatpush1.msra.mxu0 0.0
        %695 = vmatprep.subr.mxu0 0.0
        %696 = vmatpush1.msra.mxu0 0.0
        %697 = vmatprep.subr.mxu0 0.0
        %698 = vmatpush1.msra.mxu0 0.0
        %699 = vmatprep.subr.mxu0 0.0
        %700 = vmatpush1.msra.mxu0 0.0
        %701 = vmatprep.subr.mxu0 0.0
        %702 = vmatpush1.msra.mxu0 0.0
        %703 = vmatprep.subr.mxu0 0.0
        %704 = vmatpush1.msra.mxu0 0.0
        %705 = vmatprep.subr.mxu0 0.0
        %706 = vmatpush1.msra.mxu0 0.0
        %707 = vmatprep.subr.mxu0 0.0
        %708 = vmatpush1.msra.mxu0 0.0
        %709 = vmatprep.subr.mxu0 0.0
        %710 = vmatpush1.msra.mxu0 0.0
        %711 = vmatprep.subr.mxu0 0.0
        %712 = vmatpush1.msra.mxu0 0.0
        %713 = vmatprep.subr.mxu0 0.0
        %714 = vmatpush1.msra.mxu0 0.0
        %715 = vmatprep.subr.mxu0 0.0
        %716 = vmatpush1.msra.mxu0 0.0
        %717 = vmatprep.subr.mxu0 0.0
        %718 = vmatpush1.msra.mxu0 0.0
        %719 = vmatprep.subr.mxu0 0.0
        %720 = vmatpush1.msra.mxu0 0.0
        %721 = vmatprep.subr.mxu0 0.0
        %722 = vmatpush1.msra.mxu0 0.0
        %723 = vmatprep.subr.mxu0 0.0
        %724 = vmatpush1.msra.mxu0 0.0
        %725 = vmatprep.subr.mxu0 0.0
        %726 = vmatpush1.msra.mxu0 0.0
        %727 = vmatprep.subr.mxu0 0.0
        %728 = vmatpush1.msra.mxu0 0.0
        %729 = vmatprep.subr.mxu0 0.0
        %730 = vmatpush1.msra.mxu0 0.0
        %731 = vmatprep.subr.mxu0 0.0
        %732 = vmatpush1.msra.mxu0 0.0
        %733 = vmatprep.subr.mxu0 0.0
        %734 = vmatpush1.msra.mxu0 0.0
        %735 = vmatprep.subr.mxu0 0.0
        %736 = vmatpush1.msra.mxu0 0.0
        %737 = vmatprep.subr.mxu0 0.0
        %738 = vmatpush1.msra.mxu0 0.0
        %739 = vmatprep.mubr.f32.mxu0 0.0
        %740 = vmatmul.mubr.f32.gmra.mrb[0].mxu0 %v649
        %v741 = vpop.f32.mrb[0].mxu0
        %v742 = vadd.f32 0.0, %v741
        %v743 = vpop.f32.mrb[0].mxu0
        %744 = vmatprep.mubr.f32.mxu0 0.0
        %745 = vmatmul.mubr.f32.gmra.mrb[0].mxu0 %v652
        %v746 = vpop.f32.mrb[0].mxu0
        %v747 = vadd.f32 0.0, %v746
        %v748 = vpop.f32.mrb[0].mxu0
        %749 = vmatprep.mubr.f32.mxu0 0.0
        %750 = vmatmul.mubr.f32.gmra.mrb[0].mxu0 %v655
        %v751 = vpop.f32.mrb[0].mxu0
        %v752 = vadd.f32 0.0, %v751
        %v753 = vpop.f32.mrb[0].mxu0
        %754 = vmatprep.mubr.f32.mxu0 0.0
        %755 = vmatmul.mubr.f32.gmra.mrb[0].mxu0 %v658
        %v756 = vpop.f32.mrb[0].mxu0
        %v757 = vadd.f32 0.0, %v756
        %v758 = vpop.f32.mrb[0].mxu0
        %759 = vmatprep.mubr.f32.mxu0 0.0
        %760 = vmatmul.mubr.f32.gmra.mrb[0].mxu0 %v661
        %v761 = vpop.f32.mrb[0].mxu0
        %v762 = vadd.f32 0.0, %v761
        %v763 = vpop.f32.mrb[0].mxu0
        %764 = vmatprep.mubr.f32.mxu0 0.0
        %765 = vmatmul.mubr.f32.gmra.mrb[0].mxu0 %v664
        %v766 = vpop.f32.mrb[0].mxu0
        %v767 = vadd.f32 0.0, %v766
        %v768 = vpop.f32.mrb[0].mxu0
        %769 = vmatprep.mubr.f32.mxu0 0.0
        %770 = vmatmul.mubr.f32.gmra.mrb[0].mxu0 %v667
        %v771 = vpop.f32.mrb[0].mxu0
        %v772 = vadd.f32 0.0, %v771
        %v773 = vpop.f32.mrb[0].mxu0
        %774 = vmatprep.mubr.f32.mxu0 0.0
        %775 = vmatmul.mubr.f32.gmra.mrb[0].mxu0 %v670
        %v776 = vpop.f32.mrb[0].mxu0
        %v777 = vadd.f32 0.0, %v776
        %v778 = vpop.f32.mrb[0].mxu0
        %779 = vdwg.mxu0
        %v780 = vadd.f32 %v461, %v742
        %v781 = vadd.f32 %v466, %v747
        %v782 = vadd.f32 %v471, %v752
        %v783 = vadd.f32 %v476, %v757
        %v784 = vadd.f32 %v481, %v762
        %v785 = vadd.f32 %v486, %v767
        %v786 = vadd.f32 %v491, %v772
        %v787 = vadd.f32 %v496, %v777
        %s788 = scalar_lea.vmem %s196, 144
        %v789 = vld [vmem:[%s788] sm:$0xf]
        %v790 = vld [vmem:[%s788 + $0x8] sm:$0xf]
        %v791 = vld [vmem:[%s788 + $0x10] sm:$0xf]
        %v792 = vld [vmem:[%s788 + $0x18] sm:$0xf]
        %v793 = vld [vmem:[%s788 + $0x20] sm:$0xf]
        %v794 = vld [vmem:[%s788 + $0x28] sm:$0xf]
        %v795 = vld [vmem:[%s788 + $0x30] sm:$0xf]
        %v796 = vld [vmem:[%s788 + $0x38] sm:$0xf]
        %v797 = vunpack.c.l.bf16 %v789
        %v798 = vunpack.c.l.bf16 %v790
        %v799 = vunpack.c.l.bf16 %v791
        %v800 = vunpack.c.l.bf16 %v792
        %v801 = vunpack.c.l.bf16 %v793
        %v802 = vunpack.c.l.bf16 %v794
        %v803 = vunpack.c.l.bf16 %v795
        %v804 = vunpack.c.l.bf16 %v796
        %s805 = scalar_lea.vmem %s1, 12
        %v806 = vld [vmem:[%s805] sm:$0xf]
        %v808 = vsel %vm233, %v797, 0
        %v811 = vsel %vm233, %v798, 0
        %v814 = vsel %vm233, %v799, 0
        %v817 = vsel %vm233, %v800, 0
        %v820 = vsel %vm233, %v801, 0
        %v823 = vsel %vm233, %v802, 0
        %v826 = vsel %vm233, %v803, 0
        %v829 = vsel %vm233, %v804, 0
        %v832 = vsel %vm258, %v806, 0
        %834 = vmatprep.subr.mxu0 0.0
        %835 = vmatpush1.msra.mxu0 %v832
        %836 = vmatprep.subr.mxu0 0.0
        %837 = vmatpush1.msra.mxu0 0.0
        %838 = vmatprep.subr.mxu0 0.0
        %839 = vmatpush1.msra.mxu0 0.0
        %840 = vmatprep.subr.mxu0 0.0
        %841 = vmatpush1.msra.mxu0 0.0
        %842 = vmatprep.subr.mxu0 0.0
        %843 = vmatpush1.msra.mxu0 0.0
        %844 = vmatprep.subr.mxu0 0.0
        %845 = vmatpush1.msra.mxu0 0.0
        %846 = vmatprep.subr.mxu0 0.0
        %847 = vmatpush1.msra.mxu0 0.0
        %848 = vmatprep.subr.mxu0 0.0
        %849 = vmatpush1.msra.mxu0 0.0
        %850 = vmatprep.subr.mxu0 0.0
        %851 = vmatpush1.msra.mxu0 0.0
        %852 = vmatprep.subr.mxu0 0.0
        %853 = vmatpush1.msra.mxu0 0.0
        %854 = vmatprep.subr.mxu0 0.0
        %855 = vmatpush1.msra.mxu0 0.0
        %856 = vmatprep.subr.mxu0 0.0
        %857 = vmatpush1.msra.mxu0 0.0
        %858 = vmatprep.subr.mxu0 0.0
        %859 = vmatpush1.msra.mxu0 0.0
        %860 = vmatprep.subr.mxu0 0.0
        %861 = vmatpush1.msra.mxu0 0.0
        %862 = vmatprep.subr.mxu0 0.0
        %863 = vmatpush1.msra.mxu0 0.0
        %864 = vmatprep.subr.mxu0 0.0
        %865 = vmatpush1.msra.mxu0 0.0
        %866 = vmatprep.subr.mxu0 0.0
        %867 = vmatpush1.msra.mxu0 0.0
        %868 = vmatprep.subr.mxu0 0.0
        %869 = vmatpush1.msra.mxu0 0.0
        %870 = vmatprep.subr.mxu0 0.0
        %871 = vmatpush1.msra.mxu0 0.0
        %872 = vmatprep.subr.mxu0 0.0
        %873 = vmatpush1.msra.mxu0 0.0
        %874 = vmatprep.subr.mxu0 0.0
        %875 = vmatpush1.msra.mxu0 0.0
        %876 = vmatprep.subr.mxu0 0.0
        %877 = vmatpush1.msra.mxu0 0.0
        %878 = vmatprep.subr.mxu0 0.0
        %879 = vmatpush1.msra.mxu0 0.0
        %880 = vmatprep.subr.mxu0 0.0
        %881 = vmatpush1.msra.mxu0 0.0
        %882 = vmatprep.subr.mxu0 0.0
        %883 = vmatpush1.msra.mxu0 0.0
        %884 = vmatprep.subr.mxu0 0.0
        %885 = vmatpush1.msra.mxu0 0.0
        %886 = vmatprep.subr.mxu0 0.0
        %887 = vmatpush1.msra.mxu0 0.0
        %888 = vmatprep.subr.mxu0 0.0
        %889 = vmatpush1.msra.mxu0 0.0
        %890 = vmatprep.subr.mxu0 0.0
        %891 = vmatpush1.msra.mxu0 0.0
        %892 = vmatprep.subr.mxu0 0.0
        %893 = vmatpush1.msra.mxu0 0.0
        %894 = vmatprep.subr.mxu0 0.0
        %895 = vmatpush1.msra.mxu0 0.0
        %896 = vmatprep.subr.mxu0 0.0
        %897 = vmatpush1.msra.mxu0 0.0
        %898 = vmatprep.mubr.f32.mxu0 0.0
        %899 = vmatmul.mubr.f32.gmra.mrb[0].mxu0 %v808
        %v900 = vpop.f32.mrb[0].mxu0
        %v901 = vadd.f32 0.0, %v900
        %v902 = vpop.f32.mrb[0].mxu0
        %903 = vmatprep.mubr.f32.mxu0 0.0
        %904 = vmatmul.mubr.f32.gmra.mrb[0].mxu0 %v811
        %v905 = vpop.f32.mrb[0].mxu0
        %v906 = vadd.f32 0.0, %v905
        %v907 = vpop.f32.mrb[0].mxu0
        %908 = vmatprep.mubr.f32.mxu0 0.0
        %909 = vmatmul.mubr.f32.gmra.mrb[0].mxu0 %v814
        %v910 = vpop.f32.mrb[0].mxu0
        %v911 = vadd.f32 0.0, %v910
        %v912 = vpop.f32.mrb[0].mxu0
        %913 = vmatprep.mubr.f32.mxu0 0.0
        %914 = vmatmul.mubr.f32.gmra.mrb[0].mxu0 %v817
        %v915 = vpop.f32.mrb[0].mxu0
        %v916 = vadd.f32 0.0, %v915
        %v917 = vpop.f32.mrb[0].mxu0
        %918 = vmatprep.mubr.f32.mxu0 0.0
        %919 = vmatmul.mubr.f32.gmra.mrb[0].mxu0 %v820
        %v920 = vpop.f32.mrb[0].mxu0
        %v921 = vadd.f32 0.0, %v920
        %v922 = vpop.f32.mrb[0].mxu0
        %923 = vmatprep.mubr.f32.mxu0 0.0
        %924 = vmatmul.mubr.f32.gmra.mrb[0].mxu0 %v823
        %v925 = vpop.f32.mrb[0].mxu0
        %v926 = vadd.f32 0.0, %v925
        %v927 = vpop.f32.mrb[0].mxu0
        %928 = vmatprep.mubr.f32.mxu0 0.0
        %929 = vmatmul.mubr.f32.gmra.mrb[0].mxu0 %v826
        %v930 = vpop.f32.mrb[0].mxu0
        %v931 = vadd.f32 0.0, %v930
        %v932 = vpop.f32.mrb[0].mxu0
        %933 = vmatprep.mubr.f32.mxu0 0.0
        %934 = vmatmul.mubr.f32.gmra.mrb[0].mxu0 %v829
        %v935 = vpop.f32.mrb[0].mxu0
        %v936 = vadd.f32 0.0, %v935
        %v937 = vpop.f32.mrb[0].mxu0
        %938 = vdwg.mxu0
        %v939 = vadd.f32 %v780, %v901
        %v940 = vadd.f32 %v781, %v906
        %v941 = vadd.f32 %v782, %v911
        %v942 = vadd.f32 %v783, %v916
        %v943 = vadd.f32 %v784, %v921
        %v944 = vadd.f32 %v785, %v926
        %v945 = vadd.f32 %v786, %v931
        %v946 = vadd.f32 %v787, %v936
        %s947 = scalar_lea.vmem %s196, 216
        %v948 = vld [vmem:[%s947] sm:$0xf]
        %v949 = vld [vmem:[%s947 + $0x8] sm:$0xf]
        %v950 = vld [vmem:[%s947 + $0x10] sm:$0xf]
        %v951 = vld [vmem:[%s947 + $0x18] sm:$0xf]
        %v952 = vld [vmem:[%s947 + $0x20] sm:$0xf]
        %v953 = vld [vmem:[%s947 + $0x28] sm:$0xf]
        %v954 = vld [vmem:[%s947 + $0x30] sm:$0xf]
        %v955 = vld [vmem:[%s947 + $0x38] sm:$0xf]
        %v956 = vunpack.c.l.bf16 %v948
        %v957 = vunpack.c.l.bf16 %v949
        %v958 = vunpack.c.l.bf16 %v950
        %v959 = vunpack.c.l.bf16 %v951
        %v960 = vunpack.c.l.bf16 %v952
        %v961 = vunpack.c.l.bf16 %v953
        %v962 = vunpack.c.l.bf16 %v954
        %v963 = vunpack.c.l.bf16 %v955
        %s964 = scalar_lea.vmem %s1, 16
        %v965 = vld [vmem:[%s964] sm:$0xf]
        %v967 = vsel %vm233, %v956, 0
        %v970 = vsel %vm233, %v957, 0
        %v973 = vsel %vm233, %v958, 0
        %v976 = vsel %vm233, %v959, 0
        %v979 = vsel %vm233, %v960, 0
        %v982 = vsel %vm233, %v961, 0
        %v985 = vsel %vm233, %v962, 0
        %v988 = vsel %vm233, %v963, 0
        %v991 = vsel %vm258, %v965, 0
        %993 = vmatprep.subr.mxu0 0.0
        %994 = vmatpush1.msra.mxu0 %v991
        %995 = vmatprep.subr.mxu0 0.0
        %996 = vmatpush1.msra.mxu0 0.0
        %997 = vmatprep.subr.mxu0 0.0
        %998 = vmatpush1.msra.mxu0 0.0
        %999 = vmatprep.subr.mxu0 0.0
        %1000 = vmatpush1.msra.mxu0 0.0
        %1001 = vmatprep.subr.mxu0 0.0
        %1002 = vmatpush1.msra.mxu0 0.0
        %1003 = vmatprep.subr.mxu0 0.0
        %1004 = vmatpush1.msra.mxu0 0.0
        %1005 = vmatprep.subr.mxu0 0.0
        %1006 = vmatpush1.msra.mxu0 0.0
        %1007 = vmatprep.subr.mxu0 0.0
        %1008 = vmatpush1.msra.mxu0 0.0
        %1009 = vmatprep.subr.mxu0 0.0
        %1010 = vmatpush1.msra.mxu0 0.0
        %1011 = vmatprep.subr.mxu0 0.0
        %1012 = vmatpush1.msra.mxu0 0.0
        %1013 = vmatprep.subr.mxu0 0.0
        %1014 = vmatpush1.msra.mxu0 0.0
        %1015 = vmatprep.subr.mxu0 0.0
        %1016 = vmatpush1.msra.mxu0 0.0
        %1017 = vmatprep.subr.mxu0 0.0
        %1018 = vmatpush1.msra.mxu0 0.0
        %1019 = vmatprep.subr.mxu0 0.0
        %1020 = vmatpush1.msra.mxu0 0.0
        %1021 = vmatprep.subr.mxu0 0.0
        %1022 = vmatpush1.msra.mxu0 0.0
        %1023 = vmatprep.subr.mxu0 0.0
        %1024 = vmatpush1.msra.mxu0 0.0
        %1025 = vmatprep.subr.mxu0 0.0
        %1026 = vmatpush1.msra.mxu0 0.0
        %1027 = vmatprep.subr.mxu0 0.0
        %1028 = vmatpush1.msra.mxu0 0.0
        %1029 = vmatprep.subr.mxu0 0.0
        %1030 = vmatpush1.msra.mxu0 0.0
        %1031 = vmatprep.subr.mxu0 0.0
        %1032 = vmatpush1.msra.mxu0 0.0
        %1033 = vmatprep.subr.mxu0 0.0
        %1034 = vmatpush1.msra.mxu0 0.0
        %1035 = vmatprep.subr.mxu0 0.0
        %1036 = vmatpush1.msra.mxu0 0.0
        %1037 = vmatprep.subr.mxu0 0.0
        %1038 = vmatpush1.msra.mxu0 0.0
        %1039 = vmatprep.subr.mxu0 0.0
        %1040 = vmatpush1.msra.mxu0 0.0
        %1041 = vmatprep.subr.mxu0 0.0
        %1042 = vmatpush1.msra.mxu0 0.0
        %1043 = vmatprep.subr.mxu0 0.0
        %1044 = vmatpush1.msra.mxu0 0.0
        %1045 = vmatprep.subr.mxu0 0.0
        %1046 = vmatpush1.msra.mxu0 0.0
        %1047 = vmatprep.subr.mxu0 0.0
        %1048 = vmatpush1.msra.mxu0 0.0
        %1049 = vmatprep.subr.mxu0 0.0
        %1050 = vmatpush1.msra.mxu0 0.0
        %1051 = vmatprep.subr.mxu0 0.0
        %1052 = vmatpush1.msra.mxu0 0.0
        %1053 = vmatprep.subr.mxu0 0.0
        %1054 = vmatpush1.msra.mxu0 0.0
        %1055 = vmatprep.subr.mxu0 0.0
        %1056 = vmatpush1.msra.mxu0 0.0
        %1057 = vmatprep.mubr.f32.mxu0 0.0
        %1058 = vmatmul.mubr.f32.gmra.mrb[0].mxu0 %v967
        %v1059 = vpop.f32.mrb[0].mxu0
        %v1060 = vadd.f32 0.0, %v1059
        %v1061 = vpop.f32.mrb[0].mxu0
        %1062 = vmatprep.mubr.f32.mxu0 0.0
        %1063 = vmatmul.mubr.f32.gmra.mrb[0].mxu0 %v970
        %v1064 = vpop.f32.mrb[0].mxu0
        %v1065 = vadd.f32 0.0, %v1064
        %v1066 = vpop.f32.mrb[0].mxu0
        %1067 = vmatprep.mubr.f32.mxu0 0.0
        %1068 = vmatmul.mubr.f32.gmra.mrb[0].mxu0 %v973
        %v1069 = vpop.f32.mrb[0].mxu0
        %v1070 = vadd.f32 0.0, %v1069
        %v1071 = vpop.f32.mrb[0].mxu0
        %1072 = vmatprep.mubr.f32.mxu0 0.0
        %1073 = vmatmul.mubr.f32.gmra.mrb[0].mxu0 %v976
        %v1074 = vpop.f32.mrb[0].mxu0
        %v1075 = vadd.f32 0.0, %v1074
        %v1076 = vpop.f32.mrb[0].mxu0
        %1077 = vmatprep.mubr.f32.mxu0 0.0
        %1078 = vmatmul.mubr.f32.gmra.mrb[0].mxu0 %v979
        %v1079 = vpop.f32.mrb[0].mxu0
        %v1080 = vadd.f32 0.0, %v1079
        %v1081 = vpop.f32.mrb[0].mxu0
        %1082 = vmatprep.mubr.f32.mxu0 0.0
        %1083 = vmatmul.mubr.f32.gmra.mrb[0].mxu0 %v982
        %v1084 = vpop.f32.mrb[0].mxu0
        %v1085 = vadd.f32 0.0, %v1084
        %v1086 = vpop.f32.mrb[0].mxu0
        %1087 = vmatprep.mubr.f32.mxu0 0.0
        %1088 = vmatmul.mubr.f32.gmra.mrb[0].mxu0 %v985
        %v1089 = vpop.f32.mrb[0].mxu0
        %v1090 = vadd.f32 0.0, %v1089
        %v1091 = vpop.f32.mrb[0].mxu0
        %1092 = vmatprep.mubr.f32.mxu0 0.0
        %1093 = vmatmul.mubr.f32.gmra.mrb[0].mxu0 %v988
        %v1094 = vpop.f32.mrb[0].mxu0
        %v1095 = vadd.f32 0.0, %v1094
        %v1096 = vpop.f32.mrb[0].mxu0
        %1097 = vdwg.mxu0
        %v1098 = vadd.f32 %v939, %v1060
        %v1099 = vadd.f32 %v940, %v1065
        %v1100 = vadd.f32 %v941, %v1070
        %v1101 = vadd.f32 %v942, %v1075
        %v1102 = vadd.f32 %v943, %v1080
        %v1103 = vadd.f32 %v944, %v1085
        %v1104 = vadd.f32 %v945, %v1090
        %v1105 = vadd.f32 %v946, %v1095
        %v1106 = vld [vmem:[%s788] sm:$0xf]
        %v1107 = vld [vmem:[%s788 + $0x4] sm:$0x1]
        %v1108 = vld [vmem:[%s788 + $0x8] sm:$0xf]
        %v1109 = vld [vmem:[%s788 + $0xc] sm:$0x1]
        %v1110 = vld [vmem:[%s788 + $0x10] sm:$0xf]
        %v1111 = vld [vmem:[%s788 + $0x14] sm:$0x1]
        %v1112 = vld [vmem:[%s788 + $0x18] sm:$0xf]
        %v1113 = vld [vmem:[%s788 + $0x1c] sm:$0x1]
        %v1114 = vld [vmem:[%s788 + $0x20] sm:$0xf]
        %v1115 = vld [vmem:[%s788 + $0x24] sm:$0x1]
        %v1116 = vld [vmem:[%s788 + $0x28] sm:$0xf]
        %v1117 = vld [vmem:[%s788 + $0x2c] sm:$0x1]
        %v1118 = vld [vmem:[%s788 + $0x30] sm:$0xf]
        %v1119 = vld [vmem:[%s788 + $0x34] sm:$0x1]
        %v1120 = vld [vmem:[%s788 + $0x38] sm:$0xf]
        %v1121 = vld [vmem:[%s788 + $0x3c] sm:$0x1]
        %v1123 = vshrl.u32 %v1106, 16
        %v1125 = vrot.slane %v1123, 4
        %v1126 = vshll.u32 %v1106, 16
        %v1128 = vrot.slane %v1126, 5
        %v1129 = vor.u32 %v1125, %v1128
        %v1130 = vrot.slane %v1129, 4
        %v1132 = vshll.u32 %v1107, 16
        %v1134 = vrot.slane %v1132, 5
        %v1135 = vsel %vm517, %v1130, %v1134
        %v1137 = vshrl.u32 %v1108, 16
        %v1139 = vrot.slane %v1137, 4
        %v1140 = vshll.u32 %v1108, 16
        %v1142 = vrot.slane %v1140, 5
        %v1143 = vor.u32 %v1139, %v1142
        %v1144 = vrot.slane %v1143, 4
        %v1146 = vshll.u32 %v1109, 16
        %v1148 = vrot.slane %v1146, 5
        %v1149 = vsel %vm517, %v1144, %v1148
        %v1151 = vshrl.u32 %v1110, 16
        %v1153 = vrot.slane %v1151, 4
        %v1154 = vshll.u32 %v1110, 16
        %v1156 = vrot.slane %v1154, 5
        %v1157 = vor.u32 %v1153, %v1156
        %v1158 = vrot.slane %v1157, 4
        %v1160 = vshll.u32 %v1111, 16
        %v1162 = vrot.slane %v1160, 5
        %v1163 = vsel %vm517, %v1158, %v1162
        %v1165 = vshrl.u32 %v1112, 16
        %v1167 = vrot.slane %v1165, 4
        %v1168 = vshll.u32 %v1112, 16
        %v1170 = vrot.slane %v1168, 5
        %v1171 = vor.u32 %v1167, %v1170
        %v1172 = vrot.slane %v1171, 4
        %v1174 = vshll.u32 %v1113, 16
        %v1176 = vrot.slane %v1174, 5
        %v1177 = vsel %vm517, %v1172, %v1176
        %v1179 = vshrl.u32 %v1114, 16
        %v1181 = vrot.slane %v1179, 4
        %v1182 = vshll.u32 %v1114, 16
        %v1184 = vrot.slane %v1182, 5
        %v1185 = vor.u32 %v1181, %v1184
        %v1186 = vrot.slane %v1185, 4
        %v1188 = vshll.u32 %v1115, 16
        %v1190 = vrot.slane %v1188, 5
        %v1191 = vsel %vm517, %v1186, %v1190
        %v1193 = vshrl.u32 %v1116, 16
        %v1195 = vrot.slane %v1193, 4
        %v1196 = vshll.u32 %v1116, 16
        %v1198 = vrot.slane %v1196, 5
        %v1199 = vor.u32 %v1195, %v1198
        %v1200 = vrot.slane %v1199, 4
        %v1202 = vshll.u32 %v1117, 16
        %v1204 = vrot.slane %v1202, 5
        %v1205 = vsel %vm517, %v1200, %v1204
        %v1207 = vshrl.u32 %v1118, 16
        %v1209 = vrot.slane %v1207, 4
        %v1210 = vshll.u32 %v1118, 16
        %v1212 = vrot.slane %v1210, 5
        %v1213 = vor.u32 %v1209, %v1212
        %v1214 = vrot.slane %v1213, 4
        %v1216 = vshll.u32 %v1119, 16
        %v1218 = vrot.slane %v1216, 5
        %v1219 = vsel %vm517, %v1214, %v1218
        %v1221 = vshrl.u32 %v1120, 16
        %v1223 = vrot.slane %v1221, 4
        %v1224 = vshll.u32 %v1120, 16
        %v1226 = vrot.slane %v1224, 5
        %v1227 = vor.u32 %v1223, %v1226
        %v1228 = vrot.slane %v1227, 4
        %v1230 = vshll.u32 %v1121, 16
        %v1232 = vrot.slane %v1230, 5
        %v1233 = vsel %vm517, %v1228, %v1232
        %v1242 = vunpack.c.l.bf16 %v1135
        %v1243 = vunpack.c.l.bf16 %v1149
        %v1244 = vunpack.c.l.bf16 %v1163
        %v1245 = vunpack.c.l.bf16 %v1177
        %v1246 = vunpack.c.l.bf16 %v1191
        %v1247 = vunpack.c.l.bf16 %v1205
        %v1248 = vunpack.c.l.bf16 %v1219
        %v1249 = vunpack.c.l.bf16 %v1233
        %s1250 = scalar_lea.vmem %s1, 20
        %v1251 = vld [vmem:[%s1250] sm:$0xf]
        %v1253 = vsel %vm233, %v1242, 0
        %v1256 = vsel %vm233, %v1243, 0
        %v1259 = vsel %vm233, %v1244, 0
        %v1262 = vsel %vm233, %v1245, 0
        %v1265 = vsel %vm233, %v1246, 0
        %v1268 = vsel %vm233, %v1247, 0
        %v1271 = vsel %vm233, %v1248, 0
        %v1274 = vsel %vm233, %v1249, 0
        %v1277 = vsel %vm258, %v1251, 0
        %1279 = vmatprep.subr.mxu0 0.0
        %1280 = vmatpush1.msra.mxu0 %v1277
        %1281 = vmatprep.subr.mxu0 0.0
        %1282 = vmatpush1.msra.mxu0 0.0
        %1283 = vmatprep.subr.mxu0 0.0
        %1284 = vmatpush1.msra.mxu0 0.0
        %1285 = vmatprep.subr.mxu0 0.0
        %1286 = vmatpush1.msra.mxu0 0.0
        %1287 = vmatprep.subr.mxu0 0.0
        %1288 = vmatpush1.msra.mxu0 0.0
        %1289 = vmatprep.subr.mxu0 0.0
        %1290 = vmatpush1.msra.mxu0 0.0
        %1291 = vmatprep.subr.mxu0 0.0
        %1292 = vmatpush1.msra.mxu0 0.0
        %1293 = vmatprep.subr.mxu0 0.0
        %1294 = vmatpush1.msra.mxu0 0.0
        %1295 = vmatprep.subr.mxu0 0.0
        %1296 = vmatpush1.msra.mxu0 0.0
        %1297 = vmatprep.subr.mxu0 0.0
        %1298 = vmatpush1.msra.mxu0 0.0
        %1299 = vmatprep.subr.mxu0 0.0
        %1300 = vmatpush1.msra.mxu0 0.0
        %1301 = vmatprep.subr.mxu0 0.0
        %1302 = vmatpush1.msra.mxu0 0.0
        %1303 = vmatprep.subr.mxu0 0.0
        %1304 = vmatpush1.msra.mxu0 0.0
        %1305 = vmatprep.subr.mxu0 0.0
        %1306 = vmatpush1.msra.mxu0 0.0
        %1307 = vmatprep.subr.mxu0 0.0
        %1308 = vmatpush1.msra.mxu0 0.0
        %1309 = vmatprep.subr.mxu0 0.0
        %1310 = vmatpush1.msra.mxu0 0.0
        %1311 = vmatprep.subr.mxu0 0.0
        %1312 = vmatpush1.msra.mxu0 0.0
        %1313 = vmatprep.subr.mxu0 0.0
        %1314 = vmatpush1.msra.mxu0 0.0
        %1315 = vmatprep.subr.mxu0 0.0
        %1316 = vmatpush1.msra.mxu0 0.0
        %1317 = vmatprep.subr.mxu0 0.0
        %1318 = vmatpush1.msra.mxu0 0.0
        %1319 = vmatprep.subr.mxu0 0.0
        %1320 = vmatpush1.msra.mxu0 0.0
        %1321 = vmatprep.subr.mxu0 0.0
        %1322 = vmatpush1.msra.mxu0 0.0
        %1323 = vmatprep.subr.mxu0 0.0
        %1324 = vmatpush1.msra.mxu0 0.0
        %1325 = vmatprep.subr.mxu0 0.0
        %1326 = vmatpush1.msra.mxu0 0.0
        %1327 = vmatprep.subr.mxu0 0.0
        %1328 = vmatpush1.msra.mxu0 0.0
        %1329 = vmatprep.subr.mxu0 0.0
        %1330 = vmatpush1.msra.mxu0 0.0
        %1331 = vmatprep.subr.mxu0 0.0
        %1332 = vmatpush1.msra.mxu0 0.0
        %1333 = vmatprep.subr.mxu0 0.0
        %1334 = vmatpush1.msra.mxu0 0.0
        %1335 = vmatprep.subr.mxu0 0.0
        %1336 = vmatpush1.msra.mxu0 0.0
        %1337 = vmatprep.subr.mxu0 0.0
        %1338 = vmatpush1.msra.mxu0 0.0
        %1339 = vmatprep.subr.mxu0 0.0
        %1340 = vmatpush1.msra.mxu0 0.0
        %1341 = vmatprep.subr.mxu0 0.0
        %1342 = vmatpush1.msra.mxu0 0.0
        %1343 = vmatprep.mubr.f32.mxu0 0.0
        %1344 = vmatmul.mubr.f32.gmra.mrb[0].mxu0 %v1253
        %v1345 = vpop.f32.mrb[0].mxu0
        %v1346 = vadd.f32 0.0, %v1345
        %v1347 = vpop.f32.mrb[0].mxu0
        %1348 = vmatprep.mubr.f32.mxu0 0.0
        %1349 = vmatmul.mubr.f32.gmra.mrb[0].mxu0 %v1256
        %v1350 = vpop.f32.mrb[0].mxu0
        %v1351 = vadd.f32 0.0, %v1350
        %v1352 = vpop.f32.mrb[0].mxu0
        %1353 = vmatprep.mubr.f32.mxu0 0.0
        %1354 = vmatmul.mubr.f32.gmra.mrb[0].mxu0 %v1259
        %v1355 = vpop.f32.mrb[0].mxu0
        %v1356 = vadd.f32 0.0, %v1355
        %v1357 = vpop.f32.mrb[0].mxu0
        %1358 = vmatprep.mubr.f32.mxu0 0.0
        %1359 = vmatmul.mubr.f32.gmra.mrb[0].mxu0 %v1262
        %v1360 = vpop.f32.mrb[0].mxu0
        %v1361 = vadd.f32 0.0, %v1360
        %v1362 = vpop.f32.mrb[0].mxu0
        %1363 = vmatprep.mubr.f32.mxu0 0.0
        %1364 = vmatmul.mubr.f32.gmra.mrb[0].mxu0 %v1265
        %v1365 = vpop.f32.mrb[0].mxu0
        %v1366 = vadd.f32 0.0, %v1365
        %v1367 = vpop.f32.mrb[0].mxu0
        %1368 = vmatprep.mubr.f32.mxu0 0.0
        %1369 = vmatmul.mubr.f32.gmra.mrb[0].mxu0 %v1268
        %v1370 = vpop.f32.mrb[0].mxu0
        %v1371 = vadd.f32 0.0, %v1370
        %v1372 = vpop.f32.mrb[0].mxu0
        %1373 = vmatprep.mubr.f32.mxu0 0.0
        %1374 = vmatmul.mubr.f32.gmra.mrb[0].mxu0 %v1271
        %v1375 = vpop.f32.mrb[0].mxu0
        %v1376 = vadd.f32 0.0, %v1375
        %v1377 = vpop.f32.mrb[0].mxu0
        %1378 = vmatprep.mubr.f32.mxu0 0.0
        %1379 = vmatmul.mubr.f32.gmra.mrb[0].mxu0 %v1274
        %v1380 = vpop.f32.mrb[0].mxu0
        %v1381 = vadd.f32 0.0, %v1380
        %v1382 = vpop.f32.mrb[0].mxu0
        %1383 = vdwg.mxu0
        %v1384 = vadd.f32 %v1098, %v1346
        %v1385 = vadd.f32 %v1099, %v1351
        %v1386 = vadd.f32 %v1100, %v1356
        %v1387 = vadd.f32 %v1101, %v1361
        %v1388 = vadd.f32 %v1102, %v1366
        %v1389 = vadd.f32 %v1103, %v1371
        %v1390 = vadd.f32 %v1104, %v1376
        %v1391 = vadd.f32 %v1105, %v1381
        %s1392 = scalar_lea.vmem %s196, 8
        %v1393 = vld [vmem:[%s1392] sm:$0xf]
        %v1394 = vld [vmem:[%s1392 + $0x8] sm:$0xf]
        %v1395 = vld [vmem:[%s1392 + $0x10] sm:$0xf]
        %v1396 = vld [vmem:[%s1392 + $0x18] sm:$0xf]
        %v1397 = vld [vmem:[%s1392 + $0x20] sm:$0xf]
        %v1398 = vld [vmem:[%s1392 + $0x28] sm:$0xf]
        %v1399 = vld [vmem:[%s1392 + $0x30] sm:$0xf]
        %v1400 = vld [vmem:[%s1392 + $0x38] sm:$0xf]
        %v1401 = vunpack.c.l.bf16 %v1393
        %v1402 = vunpack.c.l.bf16 %v1394
        %v1403 = vunpack.c.l.bf16 %v1395
        %v1404 = vunpack.c.l.bf16 %v1396
        %v1405 = vunpack.c.l.bf16 %v1397
        %v1406 = vunpack.c.l.bf16 %v1398
        %v1407 = vunpack.c.l.bf16 %v1399
        %v1408 = vunpack.c.l.bf16 %v1400
        %s1409 = scalar_lea.vmem %s1, 24
        %v1410 = vld [vmem:[%s1409] sm:$0xf]
        %v1412 = vsel %vm233, %v1401, 0
        %v1415 = vsel %vm233, %v1402, 0
        %v1418 = vsel %vm233, %v1403, 0
        %v1421 = vsel %vm233, %v1404, 0
        %v1424 = vsel %vm233, %v1405, 0
        %v1427 = vsel %vm233, %v1406, 0
        %v1430 = vsel %vm233, %v1407, 0
        %v1433 = vsel %vm233, %v1408, 0
        %v1436 = vsel %vm258, %v1410, 0
        %1438 = vmatprep.subr.mxu0 0.0
        %1439 = vmatpush1.msra.mxu0 %v1436
        %1440 = vmatprep.subr.mxu0 0.0
        %1441 = vmatpush1.msra.mxu0 0.0
        %1442 = vmatprep.subr.mxu0 0.0
        %1443 = vmatpush1.msra.mxu0 0.0
        %1444 = vmatprep.subr.mxu0 0.0
        %1445 = vmatpush1.msra.mxu0 0.0
        %1446 = vmatprep.subr.mxu0 0.0
        %1447 = vmatpush1.msra.mxu0 0.0
        %1448 = vmatprep.subr.mxu0 0.0
        %1449 = vmatpush1.msra.mxu0 0.0
        %1450 = vmatprep.subr.mxu0 0.0
        %1451 = vmatpush1.msra.mxu0 0.0
        %1452 = vmatprep.subr.mxu0 0.0
        %1453 = vmatpush1.msra.mxu0 0.0
        %1454 = vmatprep.subr.mxu0 0.0
        %1455 = vmatpush1.msra.mxu0 0.0
        %1456 = vmatprep.subr.mxu0 0.0
        %1457 = vmatpush1.msra.mxu0 0.0
        %1458 = vmatprep.subr.mxu0 0.0
        %1459 = vmatpush1.msra.mxu0 0.0
        %1460 = vmatprep.subr.mxu0 0.0
        %1461 = vmatpush1.msra.mxu0 0.0
        %1462 = vmatprep.subr.mxu0 0.0
        %1463 = vmatpush1.msra.mxu0 0.0
        %1464 = vmatprep.subr.mxu0 0.0
        %1465 = vmatpush1.msra.mxu0 0.0
        %1466 = vmatprep.subr.mxu0 0.0
        %1467 = vmatpush1.msra.mxu0 0.0
        %1468 = vmatprep.subr.mxu0 0.0
        %1469 = vmatpush1.msra.mxu0 0.0
        %1470 = vmatprep.subr.mxu0 0.0
        %1471 = vmatpush1.msra.mxu0 0.0
        %1472 = vmatprep.subr.mxu0 0.0
        %1473 = vmatpush1.msra.mxu0 0.0
        %1474 = vmatprep.subr.mxu0 0.0
        %1475 = vmatpush1.msra.mxu0 0.0
        %1476 = vmatprep.subr.mxu0 0.0
        %1477 = vmatpush1.msra.mxu0 0.0
        %1478 = vmatprep.subr.mxu0 0.0
        %1479 = vmatpush1.msra.mxu0 0.0
        %1480 = vmatprep.subr.mxu0 0.0
        %1481 = vmatpush1.msra.mxu0 0.0
        %1482 = vmatprep.subr.mxu0 0.0
        %1483 = vmatpush1.msra.mxu0 0.0
        %1484 = vmatprep.subr.mxu0 0.0
        %1485 = vmatpush1.msra.mxu0 0.0
        %1486 = vmatprep.subr.mxu0 0.0
        %1487 = vmatpush1.msra.mxu0 0.0
        %1488 = vmatprep.subr.mxu0 0.0
        %1489 = vmatpush1.msra.mxu0 0.0
        %1490 = vmatprep.subr.mxu0 0.0
        %1491 = vmatpush1.msra.mxu0 0.0
        %1492 = vmatprep.subr.mxu0 0.0
        %1493 = vmatpush1.msra.mxu0 0.0
        %1494 = vmatprep.subr.mxu0 0.0
        %1495 = vmatpush1.msra.mxu0 0.0
        %1496 = vmatprep.subr.mxu0 0.0
        %1497 = vmatpush1.msra.mxu0 0.0
        %1498 = vmatprep.subr.mxu0 0.0
        %1499 = vmatpush1.msra.mxu0 0.0
        %1500 = vmatprep.subr.mxu0 0.0
        %1501 = vmatpush1.msra.mxu0 0.0
        %1502 = vmatprep.mubr.f32.mxu0 0.0
        %1503 = vmatmul.mubr.f32.gmra.mrb[0].mxu0 %v1412
        %v1504 = vpop.f32.mrb[0].mxu0
        %v1505 = vadd.f32 0.0, %v1504
        %v1506 = vpop.f32.mrb[0].mxu0
        %1507 = vmatprep.mubr.f32.mxu0 0.0
        %1508 = vmatmul.mubr.f32.gmra.mrb[0].mxu0 %v1415
        %v1509 = vpop.f32.mrb[0].mxu0
        %v1510 = vadd.f32 0.0, %v1509
        %v1511 = vpop.f32.mrb[0].mxu0
        %1512 = vmatprep.mubr.f32.mxu0 0.0
        %1513 = vmatmul.mubr.f32.gmra.mrb[0].mxu0 %v1418
        %v1514 = vpop.f32.mrb[0].mxu0
        %v1515 = vadd.f32 0.0, %v1514
        %v1516 = vpop.f32.mrb[0].mxu0
        %1517 = vmatprep.mubr.f32.mxu0 0.0
        %1518 = vmatmul.mubr.f32.gmra.mrb[0].mxu0 %v1421
        %v1519 = vpop.f32.mrb[0].mxu0
        %v1520 = vadd.f32 0.0, %v1519
        %v1521 = vpop.f32.mrb[0].mxu0
        %1522 = vmatprep.mubr.f32.mxu0 0.0
        %1523 = vmatmul.mubr.f32.gmra.mrb[0].mxu0 %v1424
        %v1524 = vpop.f32.mrb[0].mxu0
        %v1525 = vadd.f32 0.0, %v1524
        %v1526 = vpop.f32.mrb[0].mxu0
        %1527 = vmatprep.mubr.f32.mxu0 0.0
        %1528 = vmatmul.mubr.f32.gmra.mrb[0].mxu0 %v1427
        %v1529 = vpop.f32.mrb[0].mxu0
        %v1530 = vadd.f32 0.0, %v1529
        %v1531 = vpop.f32.mrb[0].mxu0
        %1532 = vmatprep.mubr.f32.mxu0 0.0
        %1533 = vmatmul.mubr.f32.gmra.mrb[0].mxu0 %v1430
        %v1534 = vpop.f32.mrb[0].mxu0
        %v1535 = vadd.f32 0.0, %v1534
        %v1536 = vpop.f32.mrb[0].mxu0
        %1537 = vmatprep.mubr.f32.mxu0 0.0
        %1538 = vmatmul.mubr.f32.gmra.mrb[0].mxu0 %v1433
        %v1539 = vpop.f32.mrb[0].mxu0
        %v1540 = vadd.f32 0.0, %v1539
        %v1541 = vpop.f32.mrb[0].mxu0
        %1542 = vdwg.mxu0
        %v1543 = vadd.f32 %v1384, %v1505
        %v1544 = vadd.f32 %v1385, %v1510
        %v1545 = vadd.f32 %v1386, %v1515
        %v1546 = vadd.f32 %v1387, %v1520
        %v1547 = vadd.f32 %v1388, %v1525
        %v1548 = vadd.f32 %v1389, %v1530
        %v1549 = vadd.f32 %v1390, %v1535
        %v1550 = vadd.f32 %v1391, %v1540
        %s1551 = scalar_lea.vmem %s196, 80
        %v1552 = vld [vmem:[%s1551] sm:$0xf]
        %v1553 = vld [vmem:[%s1551 + $0x8] sm:$0xf]
        %v1554 = vld [vmem:[%s1551 + $0x10] sm:$0xf]
        %v1555 = vld [vmem:[%s1551 + $0x18] sm:$0xf]
        %v1556 = vld [vmem:[%s1551 + $0x20] sm:$0xf]
        %v1557 = vld [vmem:[%s1551 + $0x28] sm:$0xf]
        %v1558 = vld [vmem:[%s1551 + $0x30] sm:$0xf]
        %v1559 = vld [vmem:[%s1551 + $0x38] sm:$0xf]
        %v1560 = vunpack.c.l.bf16 %v1552
        %v1561 = vunpack.c.l.bf16 %v1553
        %v1562 = vunpack.c.l.bf16 %v1554
        %v1563 = vunpack.c.l.bf16 %v1555
        %v1564 = vunpack.c.l.bf16 %v1556
        %v1565 = vunpack.c.l.bf16 %v1557
        %v1566 = vunpack.c.l.bf16 %v1558
        %v1567 = vunpack.c.l.bf16 %v1559
        %s1568 = scalar_lea.vmem %s1, 28
        %v1569 = vld [vmem:[%s1568] sm:$0xf]
        %v1571 = vsel %vm233, %v1560, 0
        %v1574 = vsel %vm233, %v1561, 0
        %v1577 = vsel %vm233, %v1562, 0
        %v1580 = vsel %vm233, %v1563, 0
        %v1583 = vsel %vm233, %v1564, 0
        %v1586 = vsel %vm233, %v1565, 0
        %v1589 = vsel %vm233, %v1566, 0
        %v1592 = vsel %vm233, %v1567, 0
        %v1595 = vsel %vm258, %v1569, 0
        %1597 = vmatprep.subr.mxu0 0.0
        %1598 = vmatpush1.msra.mxu0 %v1595
        %1599 = vmatprep.subr.mxu0 0.0
        %1600 = vmatpush1.msra.mxu0 0.0
        %1601 = vmatprep.subr.mxu0 0.0
        %1602 = vmatpush1.msra.mxu0 0.0
        %1603 = vmatprep.subr.mxu0 0.0
        %1604 = vmatpush1.msra.mxu0 0.0
        %1605 = vmatprep.subr.mxu0 0.0
        %1606 = vmatpush1.msra.mxu0 0.0
        %1607 = vmatprep.subr.mxu0 0.0
        %1608 = vmatpush1.msra.mxu0 0.0
        %1609 = vmatprep.subr.mxu0 0.0
        %1610 = vmatpush1.msra.mxu0 0.0
        %1611 = vmatprep.subr.mxu0 0.0
        %1612 = vmatpush1.msra.mxu0 0.0
        %1613 = vmatprep.subr.mxu0 0.0
        %1614 = vmatpush1.msra.mxu0 0.0
        %1615 = vmatprep.subr.mxu0 0.0
        %1616 = vmatpush1.msra.mxu0 0.0
        %1617 = vmatprep.subr.mxu0 0.0
        %1618 = vmatpush1.msra.mxu0 0.0
        %1619 = vmatprep.subr.mxu0 0.0
        %1620 = vmatpush1.msra.mxu0 0.0
        %1621 = vmatprep.subr.mxu0 0.0
        %1622 = vmatpush1.msra.mxu0 0.0
        %1623 = vmatprep.subr.mxu0 0.0
        %1624 = vmatpush1.msra.mxu0 0.0
        %1625 = vmatprep.subr.mxu0 0.0
        %1626 = vmatpush1.msra.mxu0 0.0
        %1627 = vmatprep.subr.mxu0 0.0
        %1628 = vmatpush1.msra.mxu0 0.0
        %1629 = vmatprep.subr.mxu0 0.0
        %1630 = vmatpush1.msra.mxu0 0.0
        %1631 = vmatprep.subr.mxu0 0.0
        %1632 = vmatpush1.msra.mxu0 0.0
        %1633 = vmatprep.subr.mxu0 0.0
        %1634 = vmatpush1.msra.mxu0 0.0
        %1635 = vmatprep.subr.mxu0 0.0
        %1636 = vmatpush1.msra.mxu0 0.0
        %1637 = vmatprep.subr.mxu0 0.0
        %1638 = vmatpush1.msra.mxu0 0.0
        %1639 = vmatprep.subr.mxu0 0.0
        %1640 = vmatpush1.msra.mxu0 0.0
        %1641 = vmatprep.subr.mxu0 0.0
        %1642 = vmatpush1.msra.mxu0 0.0
        %1643 = vmatprep.subr.mxu0 0.0
        %1644 = vmatpush1.msra.mxu0 0.0
        %1645 = vmatprep.subr.mxu0 0.0
        %1646 = vmatpush1.msra.mxu0 0.0
        %1647 = vmatprep.subr.mxu0 0.0
        %1648 = vmatpush1.msra.mxu0 0.0
        %1649 = vmatprep.subr.mxu0 0.0
        %1650 = vmatpush1.msra.mxu0 0.0
        %1651 = vmatprep.subr.mxu0 0.0
        %1652 = vmatpush1.msra.mxu0 0.0
        %1653 = vmatprep.subr.mxu0 0.0
        %1654 = vmatpush1.msra.mxu0 0.0
        %1655 = vmatprep.subr.mxu0 0.0
        %1656 = vmatpush1.msra.mxu0 0.0
        %1657 = vmatprep.subr.mxu0 0.0
        %1658 = vmatpush1.msra.mxu0 0.0
        %1659 = vmatprep.subr.mxu0 0.0
        %1660 = vmatpush1.msra.mxu0 0.0
        %1661 = vmatprep.mubr.f32.mxu0 0.0
        %1662 = vmatmul.mubr.f32.gmra.mrb[0].mxu0 %v1571
        %v1663 = vpop.f32.mrb[0].mxu0
        %v1664 = vadd.f32 0.0, %v1663
        %v1665 = vpop.f32.mrb[0].mxu0
        %1666 = vmatprep.mubr.f32.mxu0 0.0
        %1667 = vmatmul.mubr.f32.gmra.mrb[0].mxu0 %v1574
        %v1668 = vpop.f32.mrb[0].mxu0
        %v1669 = vadd.f32 0.0, %v1668
        %v1670 = vpop.f32.mrb[0].mxu0
        %1671 = vmatprep.mubr.f32.mxu0 0.0
        %1672 = vmatmul.mubr.f32.gmra.mrb[0].mxu0 %v1577
        %v1673 = vpop.f32.mrb[0].mxu0
        %v1674 = vadd.f32 0.0, %v1673
        %v1675 = vpop.f32.mrb[0].mxu0
        %1676 = vmatprep.mubr.f32.mxu0 0.0
        %1677 = vmatmul.mubr.f32.gmra.mrb[0].mxu0 %v1580
        %v1678 = vpop.f32.mrb[0].mxu0
        %v1679 = vadd.f32 0.0, %v1678
        %v1680 = vpop.f32.mrb[0].mxu0
        %1681 = vmatprep.mubr.f32.mxu0 0.0
        %1682 = vmatmul.mubr.f32.gmra.mrb[0].mxu0 %v1583
        %v1683 = vpop.f32.mrb[0].mxu0
        %v1684 = vadd.f32 0.0, %v1683
        %v1685 = vpop.f32.mrb[0].mxu0
        %1686 = vmatprep.mubr.f32.mxu0 0.0
        %1687 = vmatmul.mubr.f32.gmra.mrb[0].mxu0 %v1586
        %v1688 = vpop.f32.mrb[0].mxu0
        %v1689 = vadd.f32 0.0, %v1688
        %v1690 = vpop.f32.mrb[0].mxu0
        %1691 = vmatprep.mubr.f32.mxu0 0.0
        %1692 = vmatmul.mubr.f32.gmra.mrb[0].mxu0 %v1589
        %v1693 = vpop.f32.mrb[0].mxu0
        %v1694 = vadd.f32 0.0, %v1693
        %v1695 = vpop.f32.mrb[0].mxu0
        %1696 = vmatprep.mubr.f32.mxu0 0.0
        %1697 = vmatmul.mubr.f32.gmra.mrb[0].mxu0 %v1592
        %v1698 = vpop.f32.mrb[0].mxu0
        %v1699 = vadd.f32 0.0, %v1698
        %v1700 = vpop.f32.mrb[0].mxu0
        %1701 = vdwg.mxu0
        %v1702 = vadd.f32 %v1543, %v1664
        %v1703 = vadd.f32 %v1544, %v1669
        %v1704 = vadd.f32 %v1545, %v1674
        %v1705 = vadd.f32 %v1546, %v1679
        %v1706 = vadd.f32 %v1547, %v1684
        %v1707 = vadd.f32 %v1548, %v1689
        %v1708 = vadd.f32 %v1549, %v1694
        %v1709 = vadd.f32 %v1550, %v1699
        %v1710 = vld [vmem:[%s1392] sm:$0xf]
        %v1711 = vld [vmem:[%s1392 + $0x4] sm:$0x1]
        %v1712 = vld [vmem:[%s1392 + $0x8] sm:$0xf]
        %v1713 = vld [vmem:[%s1392 + $0xc] sm:$0x1]
        %v1714 = vld [vmem:[%s1392 + $0x10] sm:$0xf]
        %v1715 = vld [vmem:[%s1392 + $0x14] sm:$0x1]
        %v1716 = vld [vmem:[%s1392 + $0x18] sm:$0xf]
        %v1717 = vld [vmem:[%s1392 + $0x1c] sm:$0x1]
        %v1718 = vld [vmem:[%s1392 + $0x20] sm:$0xf]
        %v1719 = vld [vmem:[%s1392 + $0x24] sm:$0x1]
        %v1720 = vld [vmem:[%s1392 + $0x28] sm:$0xf]
        %v1721 = vld [vmem:[%s1392 + $0x2c] sm:$0x1]
        %v1722 = vld [vmem:[%s1392 + $0x30] sm:$0xf]
        %v1723 = vld [vmem:[%s1392 + $0x34] sm:$0x1]
        %v1724 = vld [vmem:[%s1392 + $0x38] sm:$0xf]
        %v1725 = vld [vmem:[%s1392 + $0x3c] sm:$0x1]
        %v1727 = vshrl.u32 %v1710, 16
        %v1729 = vrot.slane %v1727, 4
        %v1730 = vshll.u32 %v1710, 16
        %v1732 = vrot.slane %v1730, 5
        %v1733 = vor.u32 %v1729, %v1732
        %v1734 = vrot.slane %v1733, 4
        %v1736 = vshll.u32 %v1711, 16
        %v1738 = vrot.slane %v1736, 5
        %v1739 = vsel %vm517, %v1734, %v1738
        %v1741 = vshrl.u32 %v1712, 16
        %v1743 = vrot.slane %v1741, 4
        %v1744 = vshll.u32 %v1712, 16
        %v1746 = vrot.slane %v1744, 5
        %v1747 = vor.u32 %v1743, %v1746
        %v1748 = vrot.slane %v1747, 4
        %v1750 = vshll.u32 %v1713, 16
        %v1752 = vrot.slane %v1750, 5
        %v1753 = vsel %vm517, %v1748, %v1752
        %v1755 = vshrl.u32 %v1714, 16
        %v1757 = vrot.slane %v1755, 4
        %v1758 = vshll.u32 %v1714, 16
        %v1760 = vrot.slane %v1758, 5
        %v1761 = vor.u32 %v1757, %v1760
        %v1762 = vrot.slane %v1761, 4
        %v1764 = vshll.u32 %v1715, 16
        %v1766 = vrot.slane %v1764, 5
        %v1767 = vsel %vm517, %v1762, %v1766
        %v1769 = vshrl.u32 %v1716, 16
        %v1771 = vrot.slane %v1769, 4
        %v1772 = vshll.u32 %v1716, 16
        %v1774 = vrot.slane %v1772, 5
        %v1775 = vor.u32 %v1771, %v1774
        %v1776 = vrot.slane %v1775, 4
        %v1778 = vshll.u32 %v1717, 16
        %v1780 = vrot.slane %v1778, 5
        %v1781 = vsel %vm517, %v1776, %v1780
        %v1783 = vshrl.u32 %v1718, 16
        %v1785 = vrot.slane %v1783, 4
        %v1786 = vshll.u32 %v1718, 16
        %v1788 = vrot.slane %v1786, 5
        %v1789 = vor.u32 %v1785, %v1788
        %v1790 = vrot.slane %v1789, 4
        %v1792 = vshll.u32 %v1719, 16
        %v1794 = vrot.slane %v1792, 5
        %v1795 = vsel %vm517, %v1790, %v1794
        %v1797 = vshrl.u32 %v1720, 16
        %v1799 = vrot.slane %v1797, 4
        %v1800 = vshll.u32 %v1720, 16
        %v1802 = vrot.slane %v1800, 5
        %v1803 = vor.u32 %v1799, %v1802
        %v1804 = vrot.slane %v1803, 4
        %v1806 = vshll.u32 %v1721, 16
        %v1808 = vrot.slane %v1806, 5
        %v1809 = vsel %vm517, %v1804, %v1808
        %v1811 = vshrl.u32 %v1722, 16
        %v1813 = vrot.slane %v1811, 4
        %v1814 = vshll.u32 %v1722, 16
        %v1816 = vrot.slane %v1814, 5
        %v1817 = vor.u32 %v1813, %v1816
        %v1818 = vrot.slane %v1817, 4
        %v1820 = vshll.u32 %v1723, 16
        %v1822 = vrot.slane %v1820, 5
        %v1823 = vsel %vm517, %v1818, %v1822
        %v1825 = vshrl.u32 %v1724, 16
        %v1827 = vrot.slane %v1825, 4
        %v1828 = vshll.u32 %v1724, 16
        %v1830 = vrot.slane %v1828, 5
        %v1831 = vor.u32 %v1827, %v1830
        %v1832 = vrot.slane %v1831, 4
        %v1834 = vshll.u32 %v1725, 16
        %v1836 = vrot.slane %v1834, 5
        %v1837 = vsel %vm517, %v1832, %v1836
        %v1846 = vunpack.c.l.bf16 %v1739
        %v1847 = vunpack.c.l.bf16 %v1753
        %v1848 = vunpack.c.l.bf16 %v1767
        %v1849 = vunpack.c.l.bf16 %v1781
        %v1850 = vunpack.c.l.bf16 %v1795
        %v1851 = vunpack.c.l.bf16 %v1809
        %v1852 = vunpack.c.l.bf16 %v1823
        %v1853 = vunpack.c.l.bf16 %v1837
        %s1854 = scalar_lea.vmem %s1, 32
        %v1855 = vld [vmem:[%s1854] sm:$0xf]
        %v1857 = vsel %vm233, %v1846, 0
        %v1860 = vsel %vm233, %v1847, 0
        %v1863 = vsel %vm233, %v1848, 0
        %v1866 = vsel %vm233, %v1849, 0
        %v1869 = vsel %vm233, %v1850, 0
        %v1872 = vsel %vm233, %v1851, 0
        %v1875 = vsel %vm233, %v1852, 0
        %v1878 = vsel %vm233, %v1853, 0
        %v1881 = vsel %vm258, %v1855, 0
        %1883 = vmatprep.subr.mxu0 0.0
        %1884 = vmatpush1.msra.mxu0 %v1881
        %1885 = vmatprep.subr.mxu0 0.0
        %1886 = vmatpush1.msra.mxu0 0.0
        %1887 = vmatprep.subr.mxu0 0.0
        %1888 = vmatpush1.msra.mxu0 0.0
        %1889 = vmatprep.subr.mxu0 0.0
        %1890 = vmatpush1.msra.mxu0 0.0
        %1891 = vmatprep.subr.mxu0 0.0
        %1892 = vmatpush1.msra.mxu0 0.0
        %1893 = vmatprep.subr.mxu0 0.0
        %1894 = vmatpush1.msra.mxu0 0.0
        %1895 = vmatprep.subr.mxu0 0.0
        %1896 = vmatpush1.msra.mxu0 0.0
        %1897 = vmatprep.subr.mxu0 0.0
        %1898 = vmatpush1.msra.mxu0 0.0
        %1899 = vmatprep.subr.mxu0 0.0
        %1900 = vmatpush1.msra.mxu0 0.0
        %1901 = vmatprep.subr.mxu0 0.0
        %1902 = vmatpush1.msra.mxu0 0.0
        %1903 = vmatprep.subr.mxu0 0.0
        %1904 = vmatpush1.msra.mxu0 0.0
        %1905 = vmatprep.subr.mxu0 0.0
        %1906 = vmatpush1.msra.mxu0 0.0
        %1907 = vmatprep.subr.mxu0 0.0
        %1908 = vmatpush1.msra.mxu0 0.0
        %1909 = vmatprep.subr.mxu0 0.0
        %1910 = vmatpush1.msra.mxu0 0.0
        %1911 = vmatprep.subr.mxu0 0.0
        %1912 = vmatpush1.msra.mxu0 0.0
        %1913 = vmatprep.subr.mxu0 0.0
        %1914 = vmatpush1.msra.mxu0 0.0
        %1915 = vmatprep.subr.mxu0 0.0
        %1916 = vmatpush1.msra.mxu0 0.0
        %1917 = vmatprep.subr.mxu0 0.0
        %1918 = vmatpush1.msra.mxu0 0.0
        %1919 = vmatprep.subr.mxu0 0.0
        %1920 = vmatpush1.msra.mxu0 0.0
        %1921 = vmatprep.subr.mxu0 0.0
        %1922 = vmatpush1.msra.mxu0 0.0
        %1923 = vmatprep.subr.mxu0 0.0
        %1924 = vmatpush1.msra.mxu0 0.0
        %1925 = vmatprep.subr.mxu0 0.0
        %1926 = vmatpush1.msra.mxu0 0.0
        %1927 = vmatprep.subr.mxu0 0.0
        %1928 = vmatpush1.msra.mxu0 0.0
        %1929 = vmatprep.subr.mxu0 0.0
        %1930 = vmatpush1.msra.mxu0 0.0
        %1931 = vmatprep.subr.mxu0 0.0
        %1932 = vmatpush1.msra.mxu0 0.0
        %1933 = vmatprep.subr.mxu0 0.0
        %1934 = vmatpush1.msra.mxu0 0.0
        %1935 = vmatprep.subr.mxu0 0.0
        %1936 = vmatpush1.msra.mxu0 0.0
        %1937 = vmatprep.subr.mxu0 0.0
        %1938 = vmatpush1.msra.mxu0 0.0
        %1939 = vmatprep.subr.mxu0 0.0
        %1940 = vmatpush1.msra.mxu0 0.0
        %1941 = vmatprep.subr.mxu0 0.0
        %1942 = vmatpush1.msra.mxu0 0.0
        %1943 = vmatprep.subr.mxu0 0.0
        %1944 = vmatpush1.msra.mxu0 0.0
        %1945 = vmatprep.subr.mxu0 0.0
        %1946 = vmatpush1.msra.mxu0 0.0
        %1947 = vmatprep.mubr.f32.mxu0 0.0
        %1948 = vmatmul.mubr.f32.gmra.mrb[0].mxu0 %v1857
        %v1949 = vpop.f32.mrb[0].mxu0
        %v1950 = vadd.f32 0.0, %v1949
        %v1951 = vpop.f32.mrb[0].mxu0
        %1952 = vmatprep.mubr.f32.mxu0 0.0
        %1953 = vmatmul.mubr.f32.gmra.mrb[0].mxu0 %v1860
        %v1954 = vpop.f32.mrb[0].mxu0
        %v1955 = vadd.f32 0.0, %v1954
        %v1956 = vpop.f32.mrb[0].mxu0
        %1957 = vmatprep.mubr.f32.mxu0 0.0
        %1958 = vmatmul.mubr.f32.gmra.mrb[0].mxu0 %v1863
        %v1959 = vpop.f32.mrb[0].mxu0
        %v1960 = vadd.f32 0.0, %v1959
        %v1961 = vpop.f32.mrb[0].mxu0
        %1962 = vmatprep.mubr.f32.mxu0 0.0
        %1963 = vmatmul.mubr.f32.gmra.mrb[0].mxu0 %v1866
        %v1964 = vpop.f32.mrb[0].mxu0
        %v1965 = vadd.f32 0.0, %v1964
        %v1966 = vpop.f32.mrb[0].mxu0
        %1967 = vmatprep.mubr.f32.mxu0 0.0
        %1968 = vmatmul.mubr.f32.gmra.mrb[0].mxu0 %v1869
        %v1969 = vpop.f32.mrb[0].mxu0
        %v1970 = vadd.f32 0.0, %v1969
        %v1971 = vpop.f32.mrb[0].mxu0
        %1972 = vmatprep.mubr.f32.mxu0 0.0
        %1973 = vmatmul.mubr.f32.gmra.mrb[0].mxu0 %v1872
        %v1974 = vpop.f32.mrb[0].mxu0
        %v1975 = vadd.f32 0.0, %v1974
        %v1976 = vpop.f32.mrb[0].mxu0
        %1977 = vmatprep.mubr.f32.mxu0 0.0
        %1978 = vmatmul.mubr.f32.gmra.mrb[0].mxu0 %v1875
        %v1979 = vpop.f32.mrb[0].mxu0
        %v1980 = vadd.f32 0.0, %v1979
        %v1981 = vpop.f32.mrb[0].mxu0
        %1982 = vmatprep.mubr.f32.mxu0 0.0
        %1983 = vmatmul.mubr.f32.gmra.mrb[0].mxu0 %v1878
        %v1984 = vpop.f32.mrb[0].mxu0
        %v1985 = vadd.f32 0.0, %v1984
        %v1986 = vpop.f32.mrb[0].mxu0
        %1987 = vdwg.mxu0
        %v1988 = vadd.f32 %v1702, %v1950
        %v1989 = vadd.f32 %v1703, %v1955
        %v1990 = vadd.f32 %v1704, %v1960
        %v1991 = vadd.f32 %v1705, %v1965
        %v1992 = vadd.f32 %v1706, %v1970
        %v1993 = vadd.f32 %v1707, %v1975
        %v1994 = vadd.f32 %v1708, %v1980
        %v1995 = vadd.f32 %v1709, %v1985
        %v1996 = vld [vmem:[%s2] sm:$0x1]
        %v1998 = vlaneseq
        %v1999 = vshrl.u32 %v1998, 7
        %v2000 = vsub.s32 0, %v1999
        %v2001 = vrot.slane %v1996, %v2000
        %v2003 = vadd.f32 %v1988, %v2001
        %v2004 = vadd.f32 %v1989, %v2001
        %v2005 = vadd.f32 %v1990, %v2001
        %v2006 = vadd.f32 %v1991, %v2001
        %v2007 = vadd.f32 %v1992, %v2001
        %v2008 = vadd.f32 %v1993, %v2001
        %v2009 = vadd.f32 %v1994, %v2001
        %v2010 = vadd.f32 %v1995, %v2001
        %2011 = vxpose.xlu0.b32.start [1/16] %v2003, 128
        %2012 = vxpose.xlu0.b32.cont [2/16] %v2004, 128
        %2013 = vxpose.xlu0.b32.cont [3/16] %v2005, 128
        %2014 = vxpose.xlu0.b32.cont [4/16] %v2006, 128
        %2015 = vxpose.xlu0.b32.cont [5/16] %v2007, 128
        %2016 = vxpose.xlu0.b32.cont [6/16] %v2008, 128
        %2017 = vxpose.xlu0.b32.cont [7/16] %v2009, 128
        %2018 = vxpose.xlu0.b32.cont [8/16] %v2010, 128
        %2019 = vxpose.xlu0.b32.cont [9/16] 0.0, 128
        %2020 = vxpose.xlu0.b32.cont [10/16] 0.0, 128
        %2021 = vxpose.xlu0.b32.cont [11/16] 0.0, 128
        %2022 = vxpose.xlu0.b32.cont [12/16] 0.0, 128
        %2023 = vxpose.xlu0.b32.cont [13/16] 0.0, 128
        %2024 = vxpose.xlu0.b32.cont [14/16] 0.0, 128
        %2025 = vxpose.xlu0.b32.cont [15/16] 0.0, 128
        %2026 = vxpose.xlu0.b32.end [16/16] 0.0, 128
        %v2027 = vpop.trf.xlu0
        %v2028 = vpop.trf.xlu0
        %v2029 = vpop.trf.xlu0
        %v2030 = vpop.trf.xlu0
        %v2031 = vpop.trf.xlu0
        %v2032 = vpop.trf.xlu0
        %v2033 = vpop.trf.xlu0
        %v2034 = vpop.trf.xlu0
        %v2035 = vpop.trf.xlu0
        %v2036 = vpop.trf.xlu0
        %v2037 = vpop.trf.xlu0
        %v2038 = vpop.trf.xlu0
        %v2039 = vpop.trf.xlu0
        %v2040 = vpop.trf.xlu0
        %v2041 = vpop.trf.xlu0
        %v2042 = vpop.trf.xlu0
        %vm2043 = vcmask 523264
        %2044 = vst.msk [vmem:[%s187] sm:$0xff] %vm2043, %v2027
        %2045 = vst.msk [vmem:[%s187 + $0x8] sm:$0xff] %vm2043, %v2028
        %2046 = vst.msk [vmem:[%s187 + $0x10] sm:$0xff] %vm2043, %v2029
        %2047 = vst.msk [vmem:[%s187 + $0x18] sm:$0xff] %vm2043, %v2030
        %s2048 = sand.u32 %s109, 1
        %s2049 = scalar_lea.sflag [#allocation3], %s2048
        %s2050 = sand.u32 %s109, 1
        %s2051 = smul.addr %s2050, 32
        %s2052 = scalar_lea.vmem [#allocation2], %s2051
        // Predicated region
        $region33: #{tpu_custom_call.1} parent=31 // pred_check
          %p2053 = pneg %p119
        $region34: #{tpu_custom_call.1} parent=31 // pred_check_branch
          %2055 = sbr.rel (%p2053) target = $region36
        $region35: #{tpu_custom_call.1} parent=31 // pred_region
          %s2057 = ssub.s32 512, 512
          %2058 = vsyncadd %s2049, %s2057
          %s2059 = smul.addr %s21, 4
          %s2060 = sadd.s32 %s22, %s2059
          %s2061 = smul.addr %s2060, 128
          %s2062 = scalar_lea.hbm %s3, %s2061
          %s2063 = sshll.u32 %s2052, 4
          %s2064 = int_to_ptr.vmem [resolvable:$true] %s2063
          %2069 = dma.vmem_to_hbm [thread:$0]  %s2064, 512, %s2062, %s2049, 128, 128, 8
        $region36: #{tpu_custom_call.1} parent=31 // pred_fallthru
          _
      $region32: #{tpu_custom_call.1} parent=5 // pred_fallthru
        _
      %p2070 = scmp.le.s32.totalorder 2, %s12
      // Predicated region
      $region37: #{tpu_custom_call.1} parent=5 // pred_check
        %p2071 = pneg %p2070
      $region38: #{tpu_custom_call.1} parent=5 // pred_check_branch
        %2073 = sbr.rel (%p2071) target = $region40
      $region39: #{tpu_custom_call.1} parent=5 // pred_region
        %s2074 = ssub.s32 %s12, 2
        // Predicated region
        $region41: #{tpu_custom_call.1} parent=39 // pred_check
          %p2075 = pneg %p125
        $region42: #{tpu_custom_call.1} parent=39 // pred_check_branch
          %2077 = sbr.rel (%p2075) target = $region44
        $region43: #{tpu_custom_call.1} parent=39 // pred_region
          %s2078 = sand.u32 %s110, 1
          %s2079 = scalar_lea.sflag [#allocation3], %s2078
          %s2080 = sand.u32 %s110, 1
          %s2081 = smul.addr %s2080, 32
          %s2082 = scalar_lea.vmem [#allocation2], %s2081
          %2083 = dma.done %s2079, 512
        $region44: #{tpu_custom_call.1} parent=39 // pred_fallthru
          _
      $region40: #{tpu_custom_call.1} parent=5 // pred_fallthru
        _
    $region6: #{tpu_custom_call.1} parent=1 // loop_footer
      %s16 = sadd.s32 1, %s12
    $region7: #{tpu_custom_call.1} parent=1 // loop_footer_branch
      %11 = sbr.rel target = $region3
    $region8: #{tpu_custom_call.1} parent=1 // loop_exit
      _
    %2084 = vsyncpa [#allocation3], 1
    %s2085 = scalar_lea.sflag [#allocation3], 1
    %2086 = vsyncpa %s2085, 1

</llo_original>
